<compile_context>
chip_gen: v7x
topology: tpu7x:2x2x1
jax: 0.10.0
libtpu: 0.0.40
codegen_flags: <defaults>
</compile_context>

<pallas_src>
import math

import numpy as np

import jax
import jax.numpy as jnp
from jax import lax
from jax.experimental import pallas as pl
from jax.experimental.pallas import tpu as pltpu

ACT_SCALE = 1.0 / 0.6            # ScaledSiLU scale factor (gemnet_oc "silu")
INV_SQRT2 = 1.0 / math.sqrt(2.0)
BF16 = jnp.bfloat16
F32 = jnp.float32


def _round_up(x, mult):
    return ((x + mult - 1) // mult) * mult


def _vmem_limit_bytes():
    # Generation-aware budget: ~75% of physical VMEM (96 MiB on v5e/v6e,
    # 48 MiB on v7x), with a conservative fallback if the query fails.
    cap = 64 * 1024 * 1024
    try:
        cap = int(getattr(pltpu.get_tpu_info(), "vmem_capacity_bytes", cap))
    except Exception:
        pass
    return min((cap * 3) // 4, 100 * 1024 * 1024)


def _scaled_silu(x):
    return jax.nn.silu(x) * ACT_SCALE


def _dense(x, w_ref, activation):
    # Weight loaded at point of use; bf16 matmul, f32 accumulation.
    y = jnp.dot(x.astype(BF16), w_ref[...], preferred_element_type=F32)
    return _scaled_silu(y) if activation else y


def _residual(x, w1_ref, w2_ref):
    y = _dense(x, w1_ref, True)
    y = _dense(y, w2_ref, True)
    return (x + y) * INV_SQRT2


# ---------------------------------------------------------------------------
# Energy kernel: sorted, atom-block-grouped edges.  Grid = grouped edge tiles
# ("arbitrary").  Block-local f32 scatter into a (tile_A, E_feat) scratch, and
# the atom MLP runs as an epilogue on the last tile of each atom block.
# ---------------------------------------------------------------------------
def _make_energy_kernel(tile_A, n_pre, n_post, has_dense1, scale_sum):
    n_w = 1 + (1 if has_dense1 else 0) + 2 * (n_pre + n_post)

    def kernel(blk_ref, first_ref, last_ref,          # SMEM scalar prefetch
               idx_ref, m_ref, rbf_ref, h_ref,        # tiled VMEM inputs
               *rest):
        w_refs = rest[:n_w]                            # w_rbf + atom-MLP weights
        out_ref = rest[n_w]                            # (tile_A, A_feat) f32
        acc_ref = rest[n_w + 1]                        # (tile_A, E_feat) f32

        e = pl.program_id(0)

        @pl.when(first_ref[e] == 1)
        def _():
            acc_ref[...] = jnp.zeros_like(acc_ref)

        # basis_E = rbf @ W_rbf ; x = m * basis_E  (elementwise f32)
        basis_E = jnp.dot(rbf_ref[...], w_refs[0][...],
                          preferred_element_type=F32)
        x = m_ref[...] * basis_E                       # (tile_E, E_feat) f32

        # Block-local scatter-add over the current atom block.  local index is
        # in [0, tile_A) for real edges of this block, negative for padding
        # (idx = -1), so padding contributes exact zeros.
        local = idx_ref[...] - blk_ref[e] * tile_A     # (1, tile_E) int32
        tile_e = x.shape[0]
        onehot = (lax.broadcasted_iota(jnp.int32, (tile_A, tile_e), 0)
                  == local).astype(F32)                # exact f32 one-hot
        acc_ref[...] += jnp.dot(onehot, x, preferred_element_type=F32)

        # Epilogue: atom MLP on the finished, VMEM-resident atom block.
        @pl.when(last_ref[e] == 1)
        def _():
            xa = acc_ref[...] * scale_sum              # ScaleFactor(scale_sum)
            off = 1
            if has_dense1:                             # edge dim -> atom dim
                xa = _dense(xa, w_refs[off], True)
                off += 1
            for i in range(n_pre):                     # seq_energy_pre
                xa = _residual(xa, w_refs[off + 2 * i], w_refs[off + 2 * i + 1])
            off += 2 * n_pre
            if n_post >= 1:                            # (+h)/sqrt(2) + seq_energy2
                xa = (xa + h_ref[...]) * INV_SQRT2
                for i in range(n_post):
                    xa = _residual(xa, w_refs[off + 2 * i],
                                   w_refs[off + 2 * i + 1])
            out_ref[...] = xa

    return kernel


# ---------------------------------------------------------------------------
# Force kernel: fully edge-parallel residual MLP + rbf gating (direct_forces).
# ---------------------------------------------------------------------------
def _make_force_kernel(n_force, scale_rbf_F):
    def kernel(m_ref, rbf_ref, *rest):
        w_rbf_F_ref = rest[0]
        w_force_refs = rest[1:1 + 2 * n_force]
        out_ref = rest[1 + 2 * n_force]

        xF = m_ref[...]                                # f32 (tile_E, E_feat)
        # n_force <= 2 in GemNet-OC; a static Python loop is fine here.
        # Switch to lax.fori_loop(unroll=True) if this grows (vreg live ranges).
        for i in range(n_force):
            xF = _residual(xF, w_force_refs[2 * i], w_force_refs[2 * i + 1])
        basis_F = jnp.dot(rbf_ref[...], w_rbf_F_ref[...],
                          preferred_element_type=F32)
        out_ref[...] = xF * basis_F * scale_rbf_F      # ScaleFactor(scale_rbf_F)

    return kernel


# ---------------------------------------------------------------------------
# Wrapper
# ---------------------------------------------------------------------------
def output_block_forward(h, m, basis_rad, idx_atom, params,
                         n_pre, n_post, n_force,
                         scale_sum=1.0, scale_rbf_F=1.0,
                         tile_edges=256, tile_atoms=256):
    nAtoms, emb_atom = h.shape
    nEdges, emb_edge = m.shape
    emb_rbf = basis_rad.shape[1]
    has_dense1 = ("w_dense1" in params) and (params["w_dense1"] is not None)

    # ---- padded, lane-dense geometry ---------------------------------------
    A_feat = _round_up(emb_atom, 128)
    E_feat = _round_up(emb_edge, 128)
    R_feat = _round_up(emb_rbf, 128)
    tile_E = max(128, _round_up(min(tile_edges, nEdges), 128))  # mult of 128
    tile_A = min(_round_up(tile_atoms, 8), _round_up(nAtoms, 8))
    nA_pad = _round_up(nAtoms, tile_A)
    n_blocks = nA_pad // tile_A
    vmem_limit = _vmem_limit_bytes()

    # ---- host-side prep (concrete shapes) ----------------------------------
    h_np = np.asarray(h, np.float32)
    m_np = np.asarray(m, np.float32)
    rbf_np = np.asarray(basis_rad, np.float32)
    idx_np = np.asarray(idx_atom, np.int32)

    def pad2(x, rows, cols):
        out = np.zeros((rows, cols), np.float32)
        out[:x.shape[0], :x.shape[1]] = x
        return out

    def wT(w, rows, cols):     # torch (out, in) -> padded (in, out), bf16
        return jnp.asarray(pad2(np.asarray(w, np.float32).T, rows, cols)
                           ).astype(BF16)

    # ======================= force branch (parallel) ========================
    nE_pad_F = _round_up(nEdges, tile_E)
    m_pF = jnp.asarray(pad2(m_np, nE_pad_F, E_feat))
    rbf_pF = jnp.asarray(pad2(rbf_np, nE_pad_F, R_feat)).astype(BF16)
    w_rbf_F = wT(params["w_rbf_F"], R_feat, E_feat)
    w_force = [wT(w, E_feat, E_feat) for w in params["w_force"][:2 * n_force]]

    def full2(a):
        return pl.BlockSpec(a.shape, lambda e: (0, 0))

    xF_pad = pl.pallas_call(
        _make_force_kernel(n_force, scale_rbf_F),
        out_shape=jax.ShapeDtypeStruct((nE_pad_F, E_feat), F32),
        grid=(nE_pad_F // tile_E,),
        in_specs=[pl.BlockSpec((tile_E, E_feat), lambda e: (e, 0)),   # m
                  pl.BlockSpec((tile_E, R_feat), lambda e: (e, 0)),   # rbf
                  full2(w_rbf_F)] + [full2(w) for w in w_force],
        out_specs=pl.BlockSpec((tile_E, E_feat), lambda e: (e, 0)),
        compiler_params=pltpu.CompilerParams(
            dimension_semantics=("parallel",),
            vmem_limit_bytes=vmem_limit),
    )(m_pF, rbf_pF, w_rbf_F, *w_force)

    # ============== energy branch (sorted, block-grouped scatter) ===========
    order = np.argsort(idx_np, kind="stable")
    idx_sorted = idx_np[order]
    blk_of_edge = (idx_sorted // tile_A).astype(np.int64)
    counts = np.bincount(blk_of_edge, minlength=n_blocks).astype(np.int64)
    # every atom block gets >= 1 tile so its output block is always produced
    padded_counts = np.maximum(tile_E,
                               ((counts + tile_E - 1) // tile_E) * tile_E)
    offsets = np.concatenate([[0], np.cumsum(padded_counts)]).astype(np.int64)
    nE_grouped = int(offsets[-1])
    counts_cum = np.concatenate([[0], np.cumsum(counts)]).astype(np.int64)
    dest = offsets[blk_of_edge] + (np.arange(nEdges) - counts_cum[blk_of_edge])

    m_g = np.zeros((nE_grouped, E_feat), np.float32)
    m_g[dest, :emb_edge] = m_np[order]
    rbf_g = np.zeros((nE_grouped, R_feat), np.float32)
    rbf_g[dest, :emb_rbf] = rbf_np[order]
    idx_g = np.full((1, nE_grouped), -1, np.int32)     # padding idx = -1
    idx_g[0, dest] = idx_sorted

    n_tiles = nE_grouped // tile_E
    tiles_per_blk = (padded_counts // tile_E).astype(np.int64)
    tile_blk = np.repeat(np.arange(n_blocks), tiles_per_blk).astype(np.int32)
    tile_start = np.concatenate([[0], np.cumsum(tiles_per_blk)[:-1]]).astype(
        np.int64)
    tile_end = (np.cumsum(tiles_per_blk) - 1).astype(np.int64)
    tile_first = np.zeros((n_tiles,), np.int32)
    tile_first[tile_start] = 1
    tile_last = np.zeros((n_tiles,), np.int32)
    tile_last[tile_end] = 1

    h_p = jnp.asarray(pad2(h_np, nA_pad, A_feat))
    w_rbf = wT(params["w_rbf"], R_feat, E_feat)
    w_mlp = ([wT(params["w_dense1"], E_feat, A_feat)] if has_dense1 else []) \
        + [wT(w, A_feat, A_feat) for w in params["w_pre"][:2 * n_pre]] \
        + [wT(w, A_feat, A_feat) for w in params["w_post"][:2 * n_post]]

    def fullw(a):
        return pl.BlockSpec(a.shape, lambda e, blk, fst, lst: (0, 0))

    grid_spec = pltpu.PrefetchScalarGridSpec(
        num_scalar_prefetch=3,
        grid=(n_tiles,),
        in_specs=[
            pl.BlockSpec((1, tile_E), lambda e, blk, fst, lst: (0, e)),       # idx
            pl.BlockSpec((tile_E, E_feat), lambda e, blk, fst, lst: (e, 0)),  # m
            pl.BlockSpec((tile_E, R_feat), lambda e, blk, fst, lst: (e, 0)),  # rbf
            pl.BlockSpec((tile_A, A_feat),
                         lambda e, blk, fst, lst: (blk[e], 0)),               # h
            fullw(w_rbf),
        ] + [fullw(w) for w in w_mlp],
        out_specs=pl.BlockSpec((tile_A, A_feat),
                               lambda e, blk, fst, lst: (blk[e], 0)),
        scratch_shapes=[pltpu.VMEM((tile_A, E_feat), F32)],
    )

    xE_pad = pl.pallas_call(
        _make_energy_kernel(tile_A, n_pre, n_post, has_dense1, scale_sum),
        out_shape=jax.ShapeDtypeStruct((nA_pad, A_feat), F32),
        grid_spec=grid_spec,
        compiler_params=pltpu.CompilerParams(
            dimension_semantics=("arbitrary",),        # scatter + accumulation
            vmem_limit_bytes=vmem_limit),
    )(jnp.asarray(tile_blk), jnp.asarray(tile_first), jnp.asarray(tile_last),
      jnp.asarray(idx_g), jnp.asarray(m_g), jnp.asarray(rbf_g).astype(BF16),
      h_p, w_rbf, *w_mlp)

    return xE_pad[:nAtoms, :emb_atom], xF_pad[:nEdges, :emb_edge]


# ---------------------------------------------------------------------------
# Pure-JAX f32 reference (module semantics) for the correctness check
# ---------------------------------------------------------------------------
def reference_forward(h, m, basis_rad, idx_atom, params,
                      n_pre, n_post, n_force,
                      scale_sum=1.0, scale_rbf_F=1.0):
    nAtoms = h.shape[0]
    has_dense1 = ("w_dense1" in params) and (params["w_dense1"] is not None)

    def dense(x, w, act):
        y = x @ w.T
        return _scaled_silu(y) if act else y

    def residual(x, w1, w2):
        y = dense(dense(x, w1, True), w2, True)
        return (x + y) * INV_SQRT2

    basis_E = dense(basis_rad, params["w_rbf"], False)
    x = m * basis_E
    xE = jnp.zeros((nAtoms, m.shape[1]), x.dtype).at[idx_atom].add(x)
    xE = xE * scale_sum
    if has_dense1:
        xE = dense(xE, params["w_dense1"], True)
    for i in range(n_pre):
        xE = residual(xE, params["w_pre"][2 * i], params["w_pre"][2 * i + 1])
    if n_post >= 1:
        xE = (xE + h) * INV_SQRT2
        for i in range(n_post):
            xE = residual(xE, params["w_post"][2 * i], params["w_post"][2 * i + 1])

    xF = m
    for i in range(n_force):
        xF = residual(xF, params["w_force"][2 * i], params["w_force"][2 * i + 1])
    basis_F = dense(basis_rad, params["w_rbf_F"], False)
    xF = xF * basis_F * scale_rbf_F
    return xE, xF


if __name__ == "__main__":
    # Small shapes consistent with the module.
    nAtoms, nEdges = 8, 16
    emb_atom, emb_edge, emb_rbf = 32, 64, 16
    nHidden, nHidden_afteratom = 2, 2    # n_pre = n_force = nHidden

    key = jax.random.PRNGKey(0)
    keys = iter(jax.random.split(key, 64))

    def winit(out_f, in_f):
        return (jax.random.normal(next(keys), (out_f, in_f), jnp.float32)
                / math.sqrt(in_f))

    params = {
        "w_rbf": winit(emb_edge, emb_rbf),                  # dense_rbf
        "w_dense1": winit(emb_atom, emb_edge),              # edge->atom dense
        "w_pre": [winit(emb_atom, emb_atom) for _ in range(2 * nHidden)],
        "w_post": [winit(emb_atom, emb_atom)
                   for _ in range(2 * nHidden_afteratom)],
        "w_force": [winit(emb_edge, emb_edge) for _ in range(2 * nHidden)],
        "w_rbf_F": winit(emb_edge, emb_rbf),                # dense_rbf_F
    }

    h = jax.random.normal(next(keys), (nAtoms, emb_atom), jnp.float32)
    m = jax.random.normal(next(keys), (nEdges, emb_edge), jnp.float32)
    basis_rad = jax.random.normal(next(keys), (nEdges, emb_rbf), jnp.float32)
    idx_atom = jax.random.randint(next(keys), (nEdges,), 0, nAtoms, jnp.int32)

    x_E, x_F = output_block_forward(h, m, basis_rad, idx_atom, params,
                                    n_pre=nHidden, n_post=nHidden_afteratom,
                                    n_force=nHidden)
    jax.block_until_ready((x_E, x_F))

    x_E_ref, x_F_ref = reference_forward(h, m, basis_rad, idx_atom, params,
                                         n_pre=nHidden,
                                         n_post=nHidden_afteratom,
                                         n_force=nHidden)
    assert x_E.shape == (nAtoms, emb_atom) and x_F.shape == (nEdges, emb_edge)
    # bf16 weight matmuls with f32 accumulation vs pure-f32 reference.
    assert jnp.allclose(x_E, x_E_ref, rtol=5e-2, atol=5e-2), \
        float(jnp.max(jnp.abs(x_E - x_E_ref)))
    assert jnp.allclose(x_F, x_F_ref, rtol=5e-2, atol=5e-2), \
        float(jnp.max(jnp.abs(x_F - x_F_ref)))

    print("KERNEL_OK")
</pallas_src>

<mosaic_0001>
module attributes {stable_mosaic.version = 11 : i64} {
  func.func @kernel(%arg0: i32, %arg1: memref<128x128xf32, #tpu.memory_space<vmem>>, %arg2: memref<128x128xbf16, #tpu.memory_space<vmem>>, %arg3: memref<128x128xbf16, #tpu.memory_space<vmem>>, %arg4: memref<128x128xbf16, #tpu.memory_space<vmem>>, %arg5: memref<128x128xbf16, #tpu.memory_space<vmem>>, %arg6: memref<128x128xbf16, #tpu.memory_space<vmem>>, %arg7: memref<128x128xbf16, #tpu.memory_space<vmem>>, %arg8: memref<128x128xf32, #tpu.memory_space<vmem>>) attributes {dimension_semantics = [#tpu.dimension_semantics<parallel>], iteration_bounds = array<i64: 1>, scalar_prefetch = 0 : i64, scratch_operands = 0 : i64, tpu.core_type = #tpu.core_type<tc>, window_params = [{transform_indices = @transform_0, window_bounds = array<i64: 128, 128>}, {transform_indices = @transform_1, window_bounds = array<i64: 128, 128>}, {pipeline_mode = #tpu.pipeline_mode<synchronous>, transform_indices = @transform_2, window_bounds = array<i64: 128, 128>}, {pipeline_mode = #tpu.pipeline_mode<synchronous>, transform_indices = @transform_3, window_bounds = array<i64: 128, 128>}, {pipeline_mode = #tpu.pipeline_mode<synchronous>, transform_indices = @transform_4, window_bounds = array<i64: 128, 128>}, {pipeline_mode = #tpu.pipeline_mode<synchronous>, transform_indices = @transform_5, window_bounds = array<i64: 128, 128>}, {pipeline_mode = #tpu.pipeline_mode<synchronous>, transform_indices = @transform_6, window_bounds = array<i64: 128, 128>}, {transform_indices = @transform_7, window_bounds = array<i64: 128, 128>}]} {
    %c0 = arith.constant 0 : index
    %c0_0 = arith.constant 0 : index
    %0 = vector.load %arg1[%c0, %c0_0] : memref<128x128xf32, #tpu.memory_space<vmem>>, vector<128x128xf32>
    %1 = arith.truncf %0 : vector<128x128xf32> to vector<128x128xbf16>
    %c0_1 = arith.constant 0 : index
    %c0_2 = arith.constant 0 : index
    %2 = vector.load %arg4[%c0_1, %c0_2] : memref<128x128xbf16, #tpu.memory_space<vmem>>, vector<128x128xbf16>
    %cst = arith.constant dense<0.000000e+00> : vector<128x128xf32>
    %3 = tpu.matmul %1, %2, %cst {dimension_numbers = #tpu.dot_dimension_numbers<[1], [0], [0], [1], [0, 0, 1, 1], [], []>} : vector<128x128xbf16>, vector<128x128xbf16>, vector<128x128xf32> -> vector<128x128xf32>
    %4 = arith.negf %3 : vector<128x128xf32>
    %5 = math.exp %4 : vector<128x128xf32>
    %cst_3 = arith.constant 1.000000e+00 : f32
    %6 = vector.broadcast %cst_3 : f32 to vector<128x128xf32>
    %7 = arith.addf %6, %5 : vector<128x128xf32>
    %8 = arith.divf %6, %7 : vector<128x128xf32>
    %9 = arith.mulf %3, %8 : vector<128x128xf32>
    %cst_4 = arith.constant 1.66666663 : f32
    %10 = vector.broadcast %cst_4 : f32 to vector<128x128xf32>
    %11 = arith.mulf %9, %10 : vector<128x128xf32>
    %12 = arith.truncf %11 : vector<128x128xf32> to vector<128x128xbf16>
    %c0_5 = arith.constant 0 : index
    %c0_6 = arith.constant 0 : index
    %13 = vector.load %arg5[%c0_5, %c0_6] : memref<128x128xbf16, #tpu.memory_space<vmem>>, vector<128x128xbf16>
    %cst_7 = arith.constant dense<0.000000e+00> : vector<128x128xf32>
    %14 = tpu.matmul %12, %13, %cst_7 {dimension_numbers = #tpu.dot_dimension_numbers<[1], [0], [0], [1], [0, 0, 1, 1], [], []>} : vector<128x128xbf16>, vector<128x128xbf16>, vector<128x128xf32> -> vector<128x128xf32>
    %15 = arith.negf %14 : vector<128x128xf32>
    %16 = math.exp %15 : vector<128x128xf32>
    %cst_8 = arith.constant 1.000000e+00 : f32
    %17 = vector.broadcast %cst_8 : f32 to vector<128x128xf32>
    %18 = arith.addf %17, %16 : vector<128x128xf32>
    %19 = arith.divf %17, %18 : vector<128x128xf32>
    %20 = arith.mulf %14, %19 : vector<128x128xf32>
    %cst_9 = arith.constant 1.66666663 : f32
    %21 = vector.broadcast %cst_9 : f32 to vector<128x128xf32>
    %22 = arith.mulf %20, %21 : vector<128x128xf32>
    %23 = arith.addf %0, %22 : vector<128x128xf32>
    %cst_10 = arith.constant 0.707106769 : f32
    %24 = vector.broadcast %cst_10 : f32 to vector<128x128xf32>
    %25 = arith.mulf %23, %24 : vector<128x128xf32>
    %26 = arith.truncf %25 : vector<128x128xf32> to vector<128x128xbf16>
    %c0_11 = arith.constant 0 : index
    %c0_12 = arith.constant 0 : index
    %27 = vector.load %arg6[%c0_11, %c0_12] : memref<128x128xbf16, #tpu.memory_space<vmem>>, vector<128x128xbf16>
    %cst_13 = arith.constant dense<0.000000e+00> : vector<128x128xf32>
    %28 = tpu.matmul %26, %27, %cst_13 {dimension_numbers = #tpu.dot_dimension_numbers<[1], [0], [0], [1], [0, 0, 1, 1], [], []>} : vector<128x128xbf16>, vector<128x128xbf16>, vector<128x128xf32> -> vector<128x128xf32>
    %29 = arith.negf %28 : vector<128x128xf32>
    %30 = math.exp %29 : vector<128x128xf32>
    %cst_14 = arith.constant 1.000000e+00 : f32
    %31 = vector.broadcast %cst_14 : f32 to vector<128x128xf32>
    %32 = arith.addf %31, %30 : vector<128x128xf32>
    %33 = arith.divf %31, %32 : vector<128x128xf32>
    %34 = arith.mulf %28, %33 : vector<128x128xf32>
    %cst_15 = arith.constant 1.66666663 : f32
    %35 = vector.broadcast %cst_15 : f32 to vector<128x128xf32>
    %36 = arith.mulf %34, %35 : vector<128x128xf32>
    %37 = arith.truncf %36 : vector<128x128xf32> to vector<128x128xbf16>
    %c0_16 = arith.constant 0 : index
    %c0_17 = arith.constant 0 : index
    %38 = vector.load %arg7[%c0_16, %c0_17] : memref<128x128xbf16, #tpu.memory_space<vmem>>, vector<128x128xbf16>
    %cst_18 = arith.constant dense<0.000000e+00> : vector<128x128xf32>
    %39 = tpu.matmul %37, %38, %cst_18 {dimension_numbers = #tpu.dot_dimension_numbers<[1], [0], [0], [1], [0, 0, 1, 1], [], []>} : vector<128x128xbf16>, vector<128x128xbf16>, vector<128x128xf32> -> vector<128x128xf32>
    %40 = arith.negf %39 : vector<128x128xf32>
    %41 = math.exp %40 : vector<128x128xf32>
    %cst_19 = arith.constant 1.000000e+00 : f32
    %42 = vector.broadcast %cst_19 : f32 to vector<128x128xf32>
    %43 = arith.addf %42, %41 : vector<128x128xf32>
    %44 = arith.divf %42, %43 : vector<128x128xf32>
    %45 = arith.mulf %39, %44 : vector<128x128xf32>
    %cst_20 = arith.constant 1.66666663 : f32
    %46 = vector.broadcast %cst_20 : f32 to vector<128x128xf32>
    %47 = arith.mulf %45, %46 : vector<128x128xf32>
    %48 = arith.addf %25, %47 : vector<128x128xf32>
    %cst_21 = arith.constant 0.707106769 : f32
    %49 = vector.broadcast %cst_21 : f32 to vector<128x128xf32>
    %50 = arith.mulf %48, %49 : vector<128x128xf32>
    %c0_22 = arith.constant 0 : index
    %c0_23 = arith.constant 0 : index
    %51 = vector.load %arg2[%c0_22, %c0_23] : memref<128x128xbf16, #tpu.memory_space<vmem>>, vector<128x128xbf16>
    %c0_24 = arith.constant 0 : index
    %c0_25 = arith.constant 0 : index
    %52 = vector.load %arg3[%c0_24, %c0_25] : memref<128x128xbf16, #tpu.memory_space<vmem>>, vector<128x128xbf16>
    %cst_26 = arith.constant dense<0.000000e+00> : vector<128x128xf32>
    %53 = tpu.matmul %51, %52, %cst_26 {dimension_numbers = #tpu.dot_dimension_numbers<[1], [0], [0], [1], [0, 0, 1, 1], [], []>} : vector<128x128xbf16>, vector<128x128xbf16>, vector<128x128xf32> -> vector<128x128xf32>
    %54 = arith.mulf %50, %53 : vector<128x128xf32>
    %cst_27 = arith.constant 1.000000e+00 : f32
    %55 = vector.broadcast %cst_27 : f32 to vector<128x128xf32>
    %56 = arith.mulf %54, %55 : vector<128x128xf32>
    %c0_28 = arith.constant 0 : index
    %c0_29 = arith.constant 0 : index
    %57 = vector.load %arg8[%c0_28, %c0_29] : memref<128x128xf32, #tpu.memory_space<vmem>>, vector<128x128xf32>
    tpu.vector_store %arg8[%c0_28, %c0_29], %56 {strides = array<i32>} : memref<128x128xf32, #tpu.memory_space<vmem>>, vector<128x128xf32>,
    return
  }
  func.func @transform_0(%arg0: i32) -> (i32, i32) {
    %c0_i32 = arith.constant 0 : i32
    %c0_i32_0 = arith.constant 0 : i32
    return %arg0, %c0_i32 : i32, i32
  }
  func.func @transform_1(%arg0: i32) -> (i32, i32) {
    %c0_i32 = arith.constant 0 : i32
    %c0_i32_0 = arith.constant 0 : i32
    return %arg0, %c0_i32 : i32, i32
  }
  func.func @transform_2(%arg0: i32) -> (i32, i32) {
    %c0_i32 = arith.constant 0 : i32
    %c0_i32_0 = arith.constant 0 : i32
    %c0_i32_1 = arith.constant 0 : i32
    return %c0_i32, %c0_i32_0 : i32, i32
  }
  func.func @transform_3(%arg0: i32) -> (i32, i32) {
    %c0_i32 = arith.constant 0 : i32
    %c0_i32_0 = arith.constant 0 : i32
    %c0_i32_1 = arith.constant 0 : i32
    return %c0_i32, %c0_i32_0 : i32, i32
  }
  func.func @transform_4(%arg0: i32) -> (i32, i32) {
    %c0_i32 = arith.constant 0 : i32
    %c0_i32_0 = arith.constant 0 : i32
    %c0_i32_1 = arith.constant 0 : i32
    return %c0_i32, %c0_i32_0 : i32, i32
  }
  func.func @transform_5(%arg0: i32) -> (i32, i32) {
    %c0_i32 = arith.constant 0 : i32
    %c0_i32_0 = arith.constant 0 : i32
    %c0_i32_1 = arith.constant 0 : i32
    return %c0_i32, %c0_i32_0 : i32, i32
  }
  func.func @transform_6(%arg0: i32) -> (i32, i32) {
    %c0_i32 = arith.constant 0 : i32
    %c0_i32_0 = arith.constant 0 : i32
    %c0_i32_1 = arith.constant 0 : i32
    return %c0_i32, %c0_i32_0 : i32, i32
  }
  func.func @transform_7(%arg0: i32) -> (i32, i32) {
    %c0_i32 = arith.constant 0 : i32
    %c0_i32_0 = arith.constant 0 : i32
    return %arg0, %c0_i32 : i32, i32
  }
}

</mosaic_0001>

<llo_original>
// kernel: tpu_custom_call.1
$region0: #{tpu_custom_call.1}
  #allocation0 [shape = 'u32[]', space=smem, size = 0x4, offset = 0x4, fixed_abs, tag = 'smem constant byte address 0x4 - core index']
  #allocation1 [shape = 'u32[144,128]{1,0:T(1,128)}', space=vmem, size = 0x12000, scoped, tag = 'internal scratch']
  %s0 = inlined_call_operand.hbm [shape: f32[128,128], index: 0, kind: input, shape index: {}]
  %s1 = inlined_call_operand.hbm [shape: bf16[128,128], index: 1, kind: input, shape index: {}]
  %s2 = inlined_call_operand.hbm [shape: bf16[128,128], index: 2, kind: input, shape index: {}]
  %s3 = inlined_call_operand.hbm [shape: bf16[128,128], index: 3, kind: input, shape index: {}]
  %s4 = inlined_call_operand.hbm [shape: bf16[128,128], index: 4, kind: input, shape index: {}]
  %s5 = inlined_call_operand.hbm [shape: bf16[128,128], index: 5, kind: input, shape index: {}]
  %s6 = inlined_call_operand.hbm [shape: bf16[128,128], index: 6, kind: input, shape index: {}]
  %s7 = inlined_call_operand.hbm [shape: f32[128,128], index: 7, kind: output, shape index: {}]
  %s8 = sld [smem:[#allocation0]]
  $region66: #{tpu_custom_call.1} parent=0
    _
  %s10 = ssub.s32 1, %s8
  %s11 = scalar_select 0, %s10, %s8
  $region1: #{tpu_custom_call.1} parent=0
    #allocation2 [shape = 'u8[65536]{0}', space=vmem, size = 0x10000, scoped, tag = 'input window, operand 0, single buffered']
    #allocation3 [shape = 's32[1]{0}', space=sflag, size = 0x4, scoped, tag = 'scoped memory for tpu_custom_call.1']
    #allocation4 [shape = 's32[1]{0}', space=sflag, size = 0x4, scoped, tag = 'scoped memory for tpu_custom_call.1']
    #allocation5 [shape = 'u8[32768]{0}', space=vmem, size = 0x8000, scoped, tag = 'input window, operand 1, single buffered']
    #allocation6 [shape = 's32[1]{0}', space=sflag, size = 0x4, scoped, tag = 'scoped memory for tpu_custom_call.1']
    #allocation7 [shape = 'u8[32768]{0}', space=vmem, size = 0x8000, scoped, tag = 'input window, operand 2, single buffered']
    #allocation8 [shape = 'u8[32768]{0}', space=vmem, size = 0x8000, scoped, tag = 'input window, operand 3, single buffered']
    #allocation9 [shape = 's32[1]{0}', space=sflag, size = 0x4, scoped, tag = 'scoped memory for tpu_custom_call.1']
    #allocation10 [shape = 'u8[32768]{0}', space=vmem, size = 0x8000, scoped, tag = 'input window, operand 4, single buffered']
    #allocation11 [shape = 'u8[32768]{0}', space=vmem, size = 0x8000, scoped, tag = 'input window, operand 5, single buffered']
    #allocation12 [shape = 's32[1]{0}', space=sflag, size = 0x4, scoped, tag = 'scoped memory for tpu_custom_call.1']
    #allocation13 [shape = 'u8[32768]{0}', space=vmem, size = 0x8000, scoped, tag = 'input window, operand 6, single buffered']
    #allocation14 [shape = 'u8[65536]{0}', space=vmem, size = 0x10000, scoped, tag = 'output window, operand 0, single buffered']
    %12 = vsyncpa [#allocation3], 0
    %13 = vsyncpa [#allocation6], 0
    %14 = vsyncpa [#allocation9], 0
    %15 = vsyncpa [#allocation12], 0
    %16 = vsyncpa [#allocation4], 0
    // Predicated region
    $region2: #{tpu_custom_call.1} parent=1 // pred_check
      _
    $region3: #{tpu_custom_call.1} parent=1 // pred_check_branch
      %18 = sbr.rel (0) target = $region5
    $region4: #{tpu_custom_call.1} parent=1 // pred_region
      %s20 = ssub.s32 2048, 2048
      %21 = vsyncadd [#allocation3], %s20
      %s22 = sshll.u32 [#allocation2], 4
      %s23 = int_to_ptr.vmem [resolvable:$true] %s22
      %28 = dma.hbm_to_vmem [thread:$0]  %s0, 2048, %s23, [#allocation3], 128, 128, 8
    $region5: #{tpu_custom_call.1} parent=1 // pred_fallthru
      _
    // Predicated region
    $region6: #{tpu_custom_call.1} parent=1 // pred_check
      _
    $region7: #{tpu_custom_call.1} parent=1 // pred_check_branch
      %30 = sbr.rel (0) target = $region9
    $region8: #{tpu_custom_call.1} parent=1 // pred_region
      %s32 = ssub.s32 1024, 1024
      %33 = vsyncadd [#allocation6], %s32
      %s34 = sshll.u32 [#allocation5], 4
      %s35 = int_to_ptr.vmem [resolvable:$true] %s34
      %40 = dma.hbm_to_vmem [thread:$0]  %s1, 1024, %s35, [#allocation6], 64, 64, 4
    $region9: #{tpu_custom_call.1} parent=1 // pred_fallthru
      _
    // Predicated region
    $region10: #{tpu_custom_call.1} parent=1 // pred_check
      _
    $region11: #{tpu_custom_call.1} parent=1 // pred_check_branch
      %42 = sbr.rel (0) target = $region13
    $region12: #{tpu_custom_call.1} parent=1 // pred_region
      %s44 = ssub.s32 1024, 1024
      %45 = vsyncadd [#allocation6], %s44
      %s46 = sshll.u32 [#allocation7], 4
      %s47 = int_to_ptr.vmem [resolvable:$true] %s46
      %52 = dma.hbm_to_vmem [thread:$0]  %s2, 1024, %s47, [#allocation6], 64, 64, 4
    $region13: #{tpu_custom_call.1} parent=1 // pred_fallthru
      _
    // Predicated region
    $region14: #{tpu_custom_call.1} parent=1 // pred_check
      _
    $region15: #{tpu_custom_call.1} parent=1 // pred_check_branch
      %54 = sbr.rel (0) target = $region17
    $region16: #{tpu_custom_call.1} parent=1 // pred_region
      %s56 = ssub.s32 1024, 1024
      %57 = vsyncadd [#allocation9], %s56
      %s58 = sshll.u32 [#allocation8], 4
      %s59 = int_to_ptr.vmem [resolvable:$true] %s58
      %64 = dma.hbm_to_vmem [thread:$0]  %s3, 1024, %s59, [#allocation9], 64, 64, 4
    $region17: #{tpu_custom_call.1} parent=1 // pred_fallthru
      _
    // Predicated region
    $region18: #{tpu_custom_call.1} parent=1 // pred_check
      _
    $region19: #{tpu_custom_call.1} parent=1 // pred_check_branch
      %66 = sbr.rel (0) target = $region21
    $region20: #{tpu_custom_call.1} parent=1 // pred_region
      %s68 = ssub.s32 1024, 1024
      %69 = vsyncadd [#allocation9], %s68
      %s70 = sshll.u32 [#allocation10], 4
      %s71 = int_to_ptr.vmem [resolvable:$true] %s70
      %76 = dma.hbm_to_vmem [thread:$0]  %s4, 1024, %s71, [#allocation9], 64, 64, 4
    $region21: #{tpu_custom_call.1} parent=1 // pred_fallthru
      _
    // Predicated region
    $region22: #{tpu_custom_call.1} parent=1 // pred_check
      _
    $region23: #{tpu_custom_call.1} parent=1 // pred_check_branch
      %78 = sbr.rel (0) target = $region25
    $region24: #{tpu_custom_call.1} parent=1 // pred_region
      %s80 = ssub.s32 1024, 1024
      %81 = vsyncadd [#allocation12], %s80
      %s82 = sshll.u32 [#allocation11], 4
      %s83 = int_to_ptr.vmem [resolvable:$true] %s82
      %88 = dma.hbm_to_vmem [thread:$0]  %s5, 1024, %s83, [#allocation12], 64, 64, 4
    $region25: #{tpu_custom_call.1} parent=1 // pred_fallthru
      _
    // Predicated region
    $region26: #{tpu_custom_call.1} parent=1 // pred_check
      _
    $region27: #{tpu_custom_call.1} parent=1 // pred_check_branch
      %90 = sbr.rel (0) target = $region29
    $region28: #{tpu_custom_call.1} parent=1 // pred_region
      %s92 = ssub.s32 1024, 1024
      %93 = vsyncadd [#allocation12], %s92
      %s94 = sshll.u32 [#allocation13], 4
      %s95 = int_to_ptr.vmem [resolvable:$true] %s94
      %100 = dma.hbm_to_vmem [thread:$0]  %s6, 1024, %s95, [#allocation12], 64, 64, 4
    $region29: #{tpu_custom_call.1} parent=1 // pred_fallthru
      _
    // Predicated region
    $region30: #{tpu_custom_call.1} parent=1 // pred_check
      _
    $region31: #{tpu_custom_call.1} parent=1 // pred_check_branch
      %102 = sbr.rel (0) target = $region33
    $region32: #{tpu_custom_call.1} parent=1 // pred_region
      %103 = dma.done [#allocation3], 2048
    $region33: #{tpu_custom_call.1} parent=1 // pred_fallthru
      _
    // Predicated region
    $region34: #{tpu_custom_call.1} parent=1 // pred_check
      _
    $region35: #{tpu_custom_call.1} parent=1 // pred_check_branch
      %105 = sbr.rel (0) target = $region37
    $region36: #{tpu_custom_call.1} parent=1 // pred_region
      %106 = dma.done [#allocation6], 1024
    $region37: #{tpu_custom_call.1} parent=1 // pred_fallthru
      _
    // Predicated region
    $region38: #{tpu_custom_call.1} parent=1 // pred_check
      _
    $region39: #{tpu_custom_call.1} parent=1 // pred_check_branch
      %108 = sbr.rel (0) target = $region41
    $region40: #{tpu_custom_call.1} parent=1 // pred_region
      %109 = dma.done [#allocation6], 1024
    $region41: #{tpu_custom_call.1} parent=1 // pred_fallthru
      _
    // Predicated region
    $region42: #{tpu_custom_call.1} parent=1 // pred_check
      _
    $region43: #{tpu_custom_call.1} parent=1 // pred_check_branch
      %111 = sbr.rel (0) target = $region45
    $region44: #{tpu_custom_call.1} parent=1 // pred_region
      %112 = dma.done [#allocation9], 1024
    $region45: #{tpu_custom_call.1} parent=1 // pred_fallthru
      _
    // Predicated region
    $region46: #{tpu_custom_call.1} parent=1 // pred_check
      _
    $region47: #{tpu_custom_call.1} parent=1 // pred_check_branch
      %114 = sbr.rel (0) target = $region49
    $region48: #{tpu_custom_call.1} parent=1 // pred_region
      %115 = dma.done [#allocation9], 1024
    $region49: #{tpu_custom_call.1} parent=1 // pred_fallthru
      _
    // Predicated region
    $region50: #{tpu_custom_call.1} parent=1 // pred_check
      _
    $region51: #{tpu_custom_call.1} parent=1 // pred_check_branch
      %117 = sbr.rel (0) target = $region53
    $region52: #{tpu_custom_call.1} parent=1 // pred_region
      %118 = dma.done [#allocation12], 1024
    $region53: #{tpu_custom_call.1} parent=1 // pred_fallthru
      _
    // Predicated region
    $region54: #{tpu_custom_call.1} parent=1 // pred_check
      _
    $region55: #{tpu_custom_call.1} parent=1 // pred_check_branch
      %120 = sbr.rel (0) target = $region57
    $region56: #{tpu_custom_call.1} parent=1 // pred_region
      %121 = dma.done [#allocation12], 1024
    $region57: #{tpu_custom_call.1} parent=1 // pred_fallthru
      _
    %v123 = vld [vmem:[#allocation2] sm:$0xff]
    %v124 = vld [vmem:[#allocation2 + $0x8] sm:$0xff]
    %v125 = vld [vmem:[#allocation2 + $0x10] sm:$0xff]
    %v126 = vld [vmem:[#allocation2 + $0x18] sm:$0xff]
    %v127 = vld [vmem:[#allocation2 + $0x20] sm:$0xff]
    %v128 = vld [vmem:[#allocation2 + $0x28] sm:$0xff]
    %v129 = vld [vmem:[#allocation2 + $0x30] sm:$0xff]
    %v130 = vld [vmem:[#allocation2 + $0x38] sm:$0xff]
    %v131 = vld [vmem:[#allocation2 + $0x40] sm:$0xff]
    %v132 = vld [vmem:[#allocation2 + $0x48] sm:$0xff]
    %v133 = vld [vmem:[#allocation2 + $0x50] sm:$0xff]
    %v134 = vld [vmem:[#allocation2 + $0x58] sm:$0xff]
    %v135 = vld [vmem:[#allocation2 + $0x60] sm:$0xff]
    %v136 = vld [vmem:[#allocation2 + $0x68] sm:$0xff]
    %v137 = vld [vmem:[#allocation2 + $0x70] sm:$0xff]
    %v138 = vld [vmem:[#allocation2 + $0x78] sm:$0xff]
    %v139 = vpack.c.bf16 %v124, %v123
    %v140 = vpack.c.bf16 %v126, %v125
    %v141 = vpack.c.bf16 %v128, %v127
    %v142 = vpack.c.bf16 %v130, %v129
    %v143 = vpack.c.bf16 %v132, %v131
    %v144 = vpack.c.bf16 %v134, %v133
    %v145 = vpack.c.bf16 %v136, %v135
    %v146 = vpack.c.bf16 %v138, %v137
    %v147 = vld [vmem:[#allocation8] sm:$0xf]
    %v148 = vld [vmem:[#allocation8 + $0x4] sm:$0xf]
    %v149 = vld [vmem:[#allocation8 + $0x8] sm:$0xf]
    %v150 = vld [vmem:[#allocation8 + $0xc] sm:$0xf]
    %v151 = vld [vmem:[#allocation8 + $0x10] sm:$0xf]
    %v152 = vld [vmem:[#allocation8 + $0x14] sm:$0xf]
    %v153 = vld [vmem:[#allocation8 + $0x18] sm:$0xf]
    %v154 = vld [vmem:[#allocation8 + $0x1c] sm:$0xf]
    %v155 = vld [vmem:[#allocation8 + $0x20] sm:$0xf]
    %v156 = vld [vmem:[#allocation8 + $0x24] sm:$0xf]
    %v157 = vld [vmem:[#allocation8 + $0x28] sm:$0xf]
    %v158 = vld [vmem:[#allocation8 + $0x2c] sm:$0xf]
    %v159 = vld [vmem:[#allocation8 + $0x30] sm:$0xf]
    %v160 = vld [vmem:[#allocation8 + $0x34] sm:$0xf]
    %v161 = vld [vmem:[#allocation8 + $0x38] sm:$0xf]
    %v162 = vld [vmem:[#allocation8 + $0x3c] sm:$0xf]
    %v179 = vunpack.c.l.b16 %v147
    %v180 = vunpack.c.l.b16 %v148
    %v181 = vunpack.c.l.b16 %v149
    %v182 = vunpack.c.l.b16 %v150
    %v183 = vunpack.c.l.b16 %v151
    %v184 = vunpack.c.l.b16 %v152
    %v185 = vunpack.c.l.b16 %v153
    %v186 = vunpack.c.l.b16 %v154
    %v187 = vunpack.c.l.b16 %v155
    %v188 = vunpack.c.l.b16 %v156
    %v189 = vunpack.c.l.b16 %v157
    %v190 = vunpack.c.l.b16 %v158
    %v191 = vunpack.c.l.b16 %v159
    %v192 = vunpack.c.l.b16 %v160
    %v193 = vunpack.c.l.b16 %v161
    %v194 = vunpack.c.l.b16 %v162
    %v195 = vpack.c.b16 %v180, %v179
    %v196 = vpack.c.b16 %v182, %v181
    %v197 = vpack.c.b16 %v184, %v183
    %v198 = vpack.c.b16 %v186, %v185
    %v199 = vpack.c.b16 %v188, %v187
    %v200 = vpack.c.b16 %v190, %v189
    %v201 = vpack.c.b16 %v192, %v191
    %v202 = vpack.c.b16 %v194, %v193
    %211 = vmatprep.subr.bf16.mxu0 0
    %212 = vmatpush1.bf16.msra.mxu0 %v195
    %213 = vmatprep.subr.bf16.mxu0 0
    %214 = vmatpush1.bf16.msra.mxu0 %v196
    %215 = vmatprep.subr.bf16.mxu0 0
    %216 = vmatpush1.bf16.msra.mxu0 %v197
    %217 = vmatprep.subr.bf16.mxu0 0
    %218 = vmatpush1.bf16.msra.mxu0 %v198
    %219 = vmatprep.subr.bf16.mxu0 0
    %220 = vmatpush1.bf16.msra.mxu0 %v199
    %221 = vmatprep.subr.bf16.mxu0 0
    %222 = vmatpush1.bf16.msra.mxu0 %v200
    %223 = vmatprep.subr.bf16.mxu0 0
    %224 = vmatpush1.bf16.msra.mxu0 %v201
    %225 = vmatprep.subr.bf16.mxu0 0
    %226 = vmatpush1.bf16.msra.mxu0 %v202
    %227 = vmatprep.subr.bf16.mxu0 0
    %228 = vmatpush1.bf16.msra.mxu0 0
    %229 = vmatprep.subr.bf16.mxu0 0
    %230 = vmatpush1.bf16.msra.mxu0 0
    %231 = vmatprep.subr.bf16.mxu0 0
    %232 = vmatpush1.bf16.msra.mxu0 0
    %233 = vmatprep.subr.bf16.mxu0 0
    %234 = vmatpush1.bf16.msra.mxu0 0
    %235 = vmatprep.subr.bf16.mxu0 0
    %236 = vmatpush1.bf16.msra.mxu0 0
    %237 = vmatprep.subr.bf16.mxu0 0
    %238 = vmatpush1.bf16.msra.mxu0 0
    %239 = vmatprep.subr.bf16.mxu0 0
    %240 = vmatpush1.bf16.msra.mxu0 0
    %241 = vmatprep.subr.bf16.mxu0 0
    %242 = vmatpush1.bf16.msra.mxu0 0
    %243 = vmatprep.mubr.bf16.mxu0 0
    %244 = vmatmul.mubr.bf16.gmra.mrb[0].mxu0 %v139
    %v245 = vpop.f32.mrb[0].mxu0
    %v246 = vadd.f32 0.0, %v245
    %v247 = vpop.f32.mrb[0].mxu0
    %v248 = vpop.f32.mrb[0].mxu0
    %v249 = vadd.f32 0.0, %v248
    %v250 = vpop.f32.mrb[0].mxu0
    %251 = vmatprep.mubr.bf16.mxu0 0
    %252 = vmatmul.mubr.bf16.gmra.mrb[0].mxu0 %v140
    %v253 = vpop.f32.mrb[0].mxu0
    %v254 = vadd.f32 0.0, %v253
    %v255 = vpop.f32.mrb[0].mxu0
    %v256 = vpop.f32.mrb[0].mxu0
    %v257 = vadd.f32 0.0, %v256
    %v258 = vpop.f32.mrb[0].mxu0
    %259 = vmatprep.mubr.bf16.mxu0 0
    %260 = vmatmul.mubr.bf16.gmra.mrb[0].mxu0 %v141
    %v261 = vpop.f32.mrb[0].mxu0
    %v262 = vadd.f32 0.0, %v261
    %v263 = vpop.f32.mrb[0].mxu0
    %v264 = vpop.f32.mrb[0].mxu0
    %v265 = vadd.f32 0.0, %v264
    %v266 = vpop.f32.mrb[0].mxu0
    %267 = vmatprep.mubr.bf16.mxu0 0
    %268 = vmatmul.mubr.bf16.gmra.mrb[0].mxu0 %v142
    %v269 = vpop.f32.mrb[0].mxu0
    %v270 = vadd.f32 0.0, %v269
    %v271 = vpop.f32.mrb[0].mxu0
    %v272 = vpop.f32.mrb[0].mxu0
    %v273 = vadd.f32 0.0, %v272
    %v274 = vpop.f32.mrb[0].mxu0
    %275 = vmatprep.mubr.bf16.mxu0 0
    %276 = vmatmul.mubr.bf16.gmra.mrb[0].mxu0 %v143
    %v277 = vpop.f32.mrb[0].mxu0
    %v278 = vadd.f32 0.0, %v277
    %v279 = vpop.f32.mrb[0].mxu0
    %v280 = vpop.f32.mrb[0].mxu0
    %v281 = vadd.f32 0.0, %v280
    %v282 = vpop.f32.mrb[0].mxu0
    %283 = vmatprep.mubr.bf16.mxu0 0
    %284 = vmatmul.mubr.bf16.gmra.mrb[0].mxu0 %v144
    %v285 = vpop.f32.mrb[0].mxu0
    %v286 = vadd.f32 0.0, %v285
    %v287 = vpop.f32.mrb[0].mxu0
    %v288 = vpop.f32.mrb[0].mxu0
    %v289 = vadd.f32 0.0, %v288
    %v290 = vpop.f32.mrb[0].mxu0
    %291 = vmatprep.mubr.bf16.mxu0 0
    %292 = vmatmul.mubr.bf16.gmra.mrb[0].mxu0 %v145
    %v293 = vpop.f32.mrb[0].mxu0
    %v294 = vadd.f32 0.0, %v293
    %v295 = vpop.f32.mrb[0].mxu0
    %v296 = vpop.f32.mrb[0].mxu0
    %v297 = vadd.f32 0.0, %v296
    %v298 = vpop.f32.mrb[0].mxu0
    %299 = vmatprep.mubr.bf16.mxu0 0
    %300 = vmatmul.mubr.bf16.gmra.mrb[0].mxu0 %v146
    %v301 = vpop.f32.mrb[0].mxu0
    %v302 = vadd.f32 0.0, %v301
    %v303 = vpop.f32.mrb[0].mxu0
    %v304 = vpop.f32.mrb[0].mxu0
    %v305 = vadd.f32 0.0, %v304
    %v306 = vpop.f32.mrb[0].mxu0
    %307 = vdwg.mxu0
    %v308 = vxor.u32 %v246, 2147483648
    %v309 = vxor.u32 %v249, 2147483648
    %v310 = vxor.u32 %v254, 2147483648
    %v311 = vxor.u32 %v257, 2147483648
    %v312 = vxor.u32 %v262, 2147483648
    %v313 = vxor.u32 %v265, 2147483648
    %v314 = vxor.u32 %v270, 2147483648
    %v315 = vxor.u32 %v273, 2147483648
    %v316 = vxor.u32 %v278, 2147483648
    %v317 = vxor.u32 %v281, 2147483648
    %v318 = vxor.u32 %v286, 2147483648
    %v319 = vxor.u32 %v289, 2147483648
    %v320 = vxor.u32 %v294, 2147483648
    %v321 = vxor.u32 %v297, 2147483648
    %v322 = vxor.u32 %v302, 2147483648
    %v323 = vxor.u32 %v305, 2147483648
    %v324 = vmul.f32 %v308, 1.442695
    %v325 = vpow.pop %v324
    %v326 = vmul.f32 %v309, 1.442695
    %v327 = vpow.pop %v326
    %v328 = vmul.f32 %v310, 1.442695
    %v329 = vpow.pop %v328
    %v330 = vmul.f32 %v311, 1.442695
    %v331 = vpow.pop %v330
    %v332 = vmul.f32 %v312, 1.442695
    %v333 = vpow.pop %v332
    %v334 = vmul.f32 %v313, 1.442695
    %v335 = vpow.pop %v334
    %v336 = vmul.f32 %v314, 1.442695
    %v337 = vpow.pop %v336
    %v338 = vmul.f32 %v315, 1.442695
    %v339 = vpow.pop %v338
    %v340 = vmul.f32 %v316, 1.442695
    %v341 = vpow.pop %v340
    %v342 = vmul.f32 %v317, 1.442695
    %v343 = vpow.pop %v342
    %v344 = vmul.f32 %v318, 1.442695
    %v345 = vpow.pop %v344
    %v346 = vmul.f32 %v319, 1.442695
    %v347 = vpow.pop %v346
    %v348 = vmul.f32 %v320, 1.442695
    %v349 = vpow.pop %v348
    %v350 = vmul.f32 %v321, 1.442695
    %v351 = vpow.pop %v350
    %v352 = vmul.f32 %v322, 1.442695
    %v353 = vpow.pop %v352
    %v354 = vmul.f32 %v323, 1.442695
    %v355 = vpow.pop %v354
    %v356 = vadd.f32 %v325, 1.0
    %v357 = vadd.f32 %v327, 1.0
    %v358 = vadd.f32 %v329, 1.0
    %v359 = vadd.f32 %v331, 1.0
    %v360 = vadd.f32 %v333, 1.0
    %v361 = vadd.f32 %v335, 1.0
    %v362 = vadd.f32 %v337, 1.0
    %v363 = vadd.f32 %v339, 1.0
    %v364 = vadd.f32 %v341, 1.0
    %v365 = vadd.f32 %v343, 1.0
    %v366 = vadd.f32 %v345, 1.0
    %v367 = vadd.f32 %v347, 1.0
    %v368 = vadd.f32 %v349, 1.0
    %v369 = vadd.f32 %v351, 1.0
    %v370 = vadd.f32 %v353, 1.0
    %v371 = vadd.f32 %v355, 1.0
    %v372 = vrcp.pop %v356
    %v373 = vmul.f32 1.0, %v372
    %v374 = vrcp.pop %v357
    %v375 = vmul.f32 1.0, %v374
    %v376 = vrcp.pop %v358
    %v377 = vmul.f32 1.0, %v376
    %v378 = vrcp.pop %v359
    %v379 = vmul.f32 1.0, %v378
    %v380 = vrcp.pop %v360
    %v381 = vmul.f32 1.0, %v380
    %v382 = vrcp.pop %v361
    %v383 = vmul.f32 1.0, %v382
    %v384 = vrcp.pop %v362
    %v385 = vmul.f32 1.0, %v384
    %v386 = vrcp.pop %v363
    %v387 = vmul.f32 1.0, %v386
    %v388 = vrcp.pop %v364
    %v389 = vmul.f32 1.0, %v388
    %v390 = vrcp.pop %v365
    %v391 = vmul.f32 1.0, %v390
    %v392 = vrcp.pop %v366
    %v393 = vmul.f32 1.0, %v392
    %v394 = vrcp.pop %v367
    %v395 = vmul.f32 1.0, %v394
    %v396 = vrcp.pop %v368
    %v397 = vmul.f32 1.0, %v396
    %v398 = vrcp.pop %v369
    %v399 = vmul.f32 1.0, %v398
    %v400 = vrcp.pop %v370
    %v401 = vmul.f32 1.0, %v400
    %v402 = vrcp.pop %v371
    %v403 = vmul.f32 1.0, %v402
    %v404 = vmul.f32 %v246, %v373
    %v405 = vmul.f32 %v249, %v375
    %v406 = vmul.f32 %v254, %v377
    %v407 = vmul.f32 %v257, %v379
    %v408 = vmul.f32 %v262, %v381
    %v409 = vmul.f32 %v265, %v383
    %v410 = vmul.f32 %v270, %v385
    %v411 = vmul.f32 %v273, %v387
    %v412 = vmul.f32 %v278, %v389
    %v413 = vmul.f32 %v281, %v391
    %v414 = vmul.f32 %v286, %v393
    %v415 = vmul.f32 %v289, %v395
    %v416 = vmul.f32 %v294, %v397
    %v417 = vmul.f32 %v297, %v399
    %v418 = vmul.f32 %v302, %v401
    %v419 = vmul.f32 %v305, %v403
    %v420 = vmul.f32 %v404, 1.6666666
    %v421 = vmul.f32 %v405, 1.6666666
    %v422 = vmul.f32 %v406, 1.6666666
    %v423 = vmul.f32 %v407, 1.6666666
    %v424 = vmul.f32 %v408, 1.6666666
    %v425 = vmul.f32 %v409, 1.6666666
    %v426 = vmul.f32 %v410, 1.6666666
    %v427 = vmul.f32 %v411, 1.6666666
    %v428 = vmul.f32 %v412, 1.6666666
    %v429 = vmul.f32 %v413, 1.6666666
    %v430 = vmul.f32 %v414, 1.6666666
    %v431 = vmul.f32 %v415, 1.6666666
    %v432 = vmul.f32 %v416, 1.6666666
    %v433 = vmul.f32 %v417, 1.6666666
    %v434 = vmul.f32 %v418, 1.6666666
    %v435 = vmul.f32 %v419, 1.6666666
    %v436 = vpack.c.bf16 %v421, %v420
    %v437 = vpack.c.bf16 %v423, %v422
    %v438 = vpack.c.bf16 %v425, %v424
    %v439 = vpack.c.bf16 %v427, %v426
    %v440 = vpack.c.bf16 %v429, %v428
    %v441 = vpack.c.bf16 %v431, %v430
    %v442 = vpack.c.bf16 %v433, %v432
    %v443 = vpack.c.bf16 %v435, %v434
    %v444 = vld [vmem:[#allocation10] sm:$0xf]
    %v445 = vld [vmem:[#allocation10 + $0x4] sm:$0xf]
    %v446 = vld [vmem:[#allocation10 + $0x8] sm:$0xf]
    %v447 = vld [vmem:[#allocation10 + $0xc] sm:$0xf]
    %v448 = vld [vmem:[#allocation10 + $0x10] sm:$0xf]
    %v449 = vld [vmem:[#allocation10 + $0x14] sm:$0xf]
    %v450 = vld [vmem:[#allocation10 + $0x18] sm:$0xf]
    %v451 = vld [vmem:[#allocation10 + $0x1c] sm:$0xf]
    %v452 = vld [vmem:[#allocation10 + $0x20] sm:$0xf]
    %v453 = vld [vmem:[#allocation10 + $0x24] sm:$0xf]
    %v454 = vld [vmem:[#allocation10 + $0x28] sm:$0xf]
    %v455 = vld [vmem:[#allocation10 + $0x2c] sm:$0xf]
    %v456 = vld [vmem:[#allocation10 + $0x30] sm:$0xf]
    %v457 = vld [vmem:[#allocation10 + $0x34] sm:$0xf]
    %v458 = vld [vmem:[#allocation10 + $0x38] sm:$0xf]
    %v459 = vld [vmem:[#allocation10 + $0x3c] sm:$0xf]
    %v476 = vunpack.c.l.b16 %v444
    %v477 = vunpack.c.l.b16 %v445
    %v478 = vunpack.c.l.b16 %v446
    %v479 = vunpack.c.l.b16 %v447
    %v480 = vunpack.c.l.b16 %v448
    %v481 = vunpack.c.l.b16 %v449
    %v482 = vunpack.c.l.b16 %v450
    %v483 = vunpack.c.l.b16 %v451
    %v484 = vunpack.c.l.b16 %v452
    %v485 = vunpack.c.l.b16 %v453
    %v486 = vunpack.c.l.b16 %v454
    %v487 = vunpack.c.l.b16 %v455
    %v488 = vunpack.c.l.b16 %v456
    %v489 = vunpack.c.l.b16 %v457
    %v490 = vunpack.c.l.b16 %v458
    %v491 = vunpack.c.l.b16 %v459
    %v492 = vpack.c.b16 %v477, %v476
    %v493 = vpack.c.b16 %v479, %v478
    %v494 = vpack.c.b16 %v481, %v480
    %v495 = vpack.c.b16 %v483, %v482
    %v496 = vpack.c.b16 %v485, %v484
    %v497 = vpack.c.b16 %v487, %v486
    %v498 = vpack.c.b16 %v489, %v488
    %v499 = vpack.c.b16 %v491, %v490
    %508 = vmatprep.subr.bf16.mxu0 0
    %509 = vmatpush1.bf16.msra.mxu0 %v492
    %510 = vmatprep.subr.bf16.mxu0 0
    %511 = vmatpush1.bf16.msra.mxu0 %v493
    %512 = vmatprep.subr.bf16.mxu0 0
    %513 = vmatpush1.bf16.msra.mxu0 %v494
    %514 = vmatprep.subr.bf16.mxu0 0
    %515 = vmatpush1.bf16.msra.mxu0 %v495
    %516 = vmatprep.subr.bf16.mxu0 0
    %517 = vmatpush1.bf16.msra.mxu0 %v496
    %518 = vmatprep.subr.bf16.mxu0 0
    %519 = vmatpush1.bf16.msra.mxu0 %v497
    %520 = vmatprep.subr.bf16.mxu0 0
    %521 = vmatpush1.bf16.msra.mxu0 %v498
    %522 = vmatprep.subr.bf16.mxu0 0
    %523 = vmatpush1.bf16.msra.mxu0 %v499
    %524 = vmatprep.subr.bf16.mxu0 0
    %525 = vmatpush1.bf16.msra.mxu0 0
    %526 = vmatprep.subr.bf16.mxu0 0
    %527 = vmatpush1.bf16.msra.mxu0 0
    %528 = vmatprep.subr.bf16.mxu0 0
    %529 = vmatpush1.bf16.msra.mxu0 0
    %530 = vmatprep.subr.bf16.mxu0 0
    %531 = vmatpush1.bf16.msra.mxu0 0
    %532 = vmatprep.subr.bf16.mxu0 0
    %533 = vmatpush1.bf16.msra.mxu0 0
    %534 = vmatprep.subr.bf16.mxu0 0
    %535 = vmatpush1.bf16.msra.mxu0 0
    %536 = vmatprep.subr.bf16.mxu0 0
    %537 = vmatpush1.bf16.msra.mxu0 0
    %538 = vmatprep.subr.bf16.mxu0 0
    %539 = vmatpush1.bf16.msra.mxu0 0
    %540 = vmatprep.mubr.bf16.mxu0 0
    %541 = vmatmul.mubr.bf16.gmra.mrb[0].mxu0 %v436
    %v542 = vpop.f32.mrb[0].mxu0
    %v543 = vadd.f32 0.0, %v542
    %v544 = vpop.f32.mrb[0].mxu0
    %v545 = vpop.f32.mrb[0].mxu0
    %v546 = vadd.f32 0.0, %v545
    %v547 = vpop.f32.mrb[0].mxu0
    %548 = vmatprep.mubr.bf16.mxu0 0
    %549 = vmatmul.mubr.bf16.gmra.mrb[0].mxu0 %v437
    %v550 = vpop.f32.mrb[0].mxu0
    %v551 = vadd.f32 0.0, %v550
    %v552 = vpop.f32.mrb[0].mxu0
    %v553 = vpop.f32.mrb[0].mxu0
    %v554 = vadd.f32 0.0, %v553
    %v555 = vpop.f32.mrb[0].mxu0
    %556 = vmatprep.mubr.bf16.mxu0 0
    %557 = vmatmul.mubr.bf16.gmra.mrb[0].mxu0 %v438
    %v558 = vpop.f32.mrb[0].mxu0
    %v559 = vadd.f32 0.0, %v558
    %v560 = vpop.f32.mrb[0].mxu0
    %v561 = vpop.f32.mrb[0].mxu0
    %v562 = vadd.f32 0.0, %v561
    %v563 = vpop.f32.mrb[0].mxu0
    %564 = vmatprep.mubr.bf16.mxu0 0
    %565 = vmatmul.mubr.bf16.gmra.mrb[0].mxu0 %v439
    %v566 = vpop.f32.mrb[0].mxu0
    %v567 = vadd.f32 0.0, %v566
    %v568 = vpop.f32.mrb[0].mxu0
    %v569 = vpop.f32.mrb[0].mxu0
    %v570 = vadd.f32 0.0, %v569
    %v571 = vpop.f32.mrb[0].mxu0
    %572 = vmatprep.mubr.bf16.mxu0 0
    %573 = vmatmul.mubr.bf16.gmra.mrb[0].mxu0 %v440
    %v574 = vpop.f32.mrb[0].mxu0
    %v575 = vadd.f32 0.0, %v574
    %v576 = vpop.f32.mrb[0].mxu0
    %v577 = vpop.f32.mrb[0].mxu0
    %v578 = vadd.f32 0.0, %v577
    %v579 = vpop.f32.mrb[0].mxu0
    %580 = vmatprep.mubr.bf16.mxu0 0
    %581 = vmatmul.mubr.bf16.gmra.mrb[0].mxu0 %v441
    %v582 = vpop.f32.mrb[0].mxu0
    %v583 = vadd.f32 0.0, %v582
    %v584 = vpop.f32.mrb[0].mxu0
    %v585 = vpop.f32.mrb[0].mxu0
    %v586 = vadd.f32 0.0, %v585
    %v587 = vpop.f32.mrb[0].mxu0
    %588 = vmatprep.mubr.bf16.mxu0 0
    %589 = vmatmul.mubr.bf16.gmra.mrb[0].mxu0 %v442
    %v590 = vpop.f32.mrb[0].mxu0
    %v591 = vadd.f32 0.0, %v590
    %v592 = vpop.f32.mrb[0].mxu0
    %v593 = vpop.f32.mrb[0].mxu0
    %v594 = vadd.f32 0.0, %v593
    %v595 = vpop.f32.mrb[0].mxu0
    %596 = vmatprep.mubr.bf16.mxu0 0
    %597 = vmatmul.mubr.bf16.gmra.mrb[0].mxu0 %v443
    %v598 = vpop.f32.mrb[0].mxu0
    %v599 = vadd.f32 0.0, %v598
    %v600 = vpop.f32.mrb[0].mxu0
    %v601 = vpop.f32.mrb[0].mxu0
    %v602 = vadd.f32 0.0, %v601
    %v603 = vpop.f32.mrb[0].mxu0
    %604 = vdwg.mxu0
    %v605 = vxor.u32 %v543, 2147483648
    %v606 = vxor.u32 %v546, 2147483648
    %v607 = vxor.u32 %v551, 2147483648
    %v608 = vxor.u32 %v554, 2147483648
    %v609 = vxor.u32 %v559, 2147483648
    %v610 = vxor.u32 %v562, 2147483648
    %v611 = vxor.u32 %v567, 2147483648
    %v612 = vxor.u32 %v570, 2147483648
    %v613 = vxor.u32 %v575, 2147483648
    %v614 = vxor.u32 %v578, 2147483648
    %v615 = vxor.u32 %v583, 2147483648
    %v616 = vxor.u32 %v586, 2147483648
    %v617 = vxor.u32 %v591, 2147483648
    %v618 = vxor.u32 %v594, 2147483648
    %v619 = vxor.u32 %v599, 2147483648
    %v620 = vxor.u32 %v602, 2147483648
    %v621 = vmul.f32 %v605, 1.442695
    %v622 = vpow.pop %v621
    %v623 = vmul.f32 %v606, 1.442695
    %v624 = vpow.pop %v623
    %v625 = vmul.f32 %v607, 1.442695
    %v626 = vpow.pop %v625
    %v627 = vmul.f32 %v608, 1.442695
    %v628 = vpow.pop %v627
    %v629 = vmul.f32 %v609, 1.442695
    %v630 = vpow.pop %v629
    %v631 = vmul.f32 %v610, 1.442695
    %v632 = vpow.pop %v631
    %v633 = vmul.f32 %v611, 1.442695
    %v634 = vpow.pop %v633
    %v635 = vmul.f32 %v612, 1.442695
    %v636 = vpow.pop %v635
    %v637 = vmul.f32 %v613, 1.442695
    %v638 = vpow.pop %v637
    %v639 = vmul.f32 %v614, 1.442695
    %v640 = vpow.pop %v639
    %v641 = vmul.f32 %v615, 1.442695
    %v642 = vpow.pop %v641
    %v643 = vmul.f32 %v616, 1.442695
    %v644 = vpow.pop %v643
    %v645 = vmul.f32 %v617, 1.442695
    %v646 = vpow.pop %v645
    %v647 = vmul.f32 %v618, 1.442695
    %v648 = vpow.pop %v647
    %v649 = vmul.f32 %v619, 1.442695
    %v650 = vpow.pop %v649
    %v651 = vmul.f32 %v620, 1.442695
    %v652 = vpow.pop %v651
    %v653 = vadd.f32 %v622, 1.0
    %v654 = vadd.f32 %v624, 1.0
    %v655 = vadd.f32 %v626, 1.0
    %v656 = vadd.f32 %v628, 1.0
    %v657 = vadd.f32 %v630, 1.0
    %v658 = vadd.f32 %v632, 1.0
    %v659 = vadd.f32 %v634, 1.0
    %v660 = vadd.f32 %v636, 1.0
    %v661 = vadd.f32 %v638, 1.0
    %v662 = vadd.f32 %v640, 1.0
    %v663 = vadd.f32 %v642, 1.0
    %v664 = vadd.f32 %v644, 1.0
    %v665 = vadd.f32 %v646, 1.0
    %v666 = vadd.f32 %v648, 1.0
    %v667 = vadd.f32 %v650, 1.0
    %v668 = vadd.f32 %v652, 1.0
    %v669 = vrcp.pop %v653
    %v670 = vmul.f32 1.0, %v669
    %v671 = vrcp.pop %v654
    %v672 = vmul.f32 1.0, %v671
    %v673 = vrcp.pop %v655
    %v674 = vmul.f32 1.0, %v673
    %v675 = vrcp.pop %v656
    %v676 = vmul.f32 1.0, %v675
    %v677 = vrcp.pop %v657
    %v678 = vmul.f32 1.0, %v677
    %v679 = vrcp.pop %v658
    %v680 = vmul.f32 1.0, %v679
    %v681 = vrcp.pop %v659
    %v682 = vmul.f32 1.0, %v681
    %v683 = vrcp.pop %v660
    %v684 = vmul.f32 1.0, %v683
    %v685 = vrcp.pop %v661
    %v686 = vmul.f32 1.0, %v685
    %v687 = vrcp.pop %v662
    %v688 = vmul.f32 1.0, %v687
    %v689 = vrcp.pop %v663
    %v690 = vmul.f32 1.0, %v689
    %v691 = vrcp.pop %v664
    %v692 = vmul.f32 1.0, %v691
    %v693 = vrcp.pop %v665
    %v694 = vmul.f32 1.0, %v693
    %v695 = vrcp.pop %v666
    %v696 = vmul.f32 1.0, %v695
    %v697 = vrcp.pop %v667
    %v698 = vmul.f32 1.0, %v697
    %v699 = vrcp.pop %v668
    %v700 = vmul.f32 1.0, %v699
    %v701 = vmul.f32 %v543, %v670
    %v702 = vmul.f32 %v546, %v672
    %v703 = vmul.f32 %v551, %v674
    %v704 = vmul.f32 %v554, %v676
    %v705 = vmul.f32 %v559, %v678
    %v706 = vmul.f32 %v562, %v680
    %v707 = vmul.f32 %v567, %v682
    %v708 = vmul.f32 %v570, %v684
    %v709 = vmul.f32 %v575, %v686
    %v710 = vmul.f32 %v578, %v688
    %v711 = vmul.f32 %v583, %v690
    %v712 = vmul.f32 %v586, %v692
    %v713 = vmul.f32 %v591, %v694
    %v714 = vmul.f32 %v594, %v696
    %v715 = vmul.f32 %v599, %v698
    %v716 = vmul.f32 %v602, %v700
    %v717 = vmul.f32 %v701, 1.6666666
    %v718 = vmul.f32 %v702, 1.6666666
    %v719 = vmul.f32 %v703, 1.6666666
    %v720 = vmul.f32 %v704, 1.6666666
    %v721 = vmul.f32 %v705, 1.6666666
    %v722 = vmul.f32 %v706, 1.6666666
    %v723 = vmul.f32 %v707, 1.6666666
    %v724 = vmul.f32 %v708, 1.6666666
    %v725 = vmul.f32 %v709, 1.6666666
    %v726 = vmul.f32 %v710, 1.6666666
    %v727 = vmul.f32 %v711, 1.6666666
    %v728 = vmul.f32 %v712, 1.6666666
    %v729 = vmul.f32 %v713, 1.6666666
    %v730 = vmul.f32 %v714, 1.6666666
    %v731 = vmul.f32 %v715, 1.6666666
    %v732 = vmul.f32 %v716, 1.6666666
    %v733 = vadd.f32 %v123, %v717
    %v734 = vadd.f32 %v124, %v718
    %v735 = vadd.f32 %v125, %v719
    %v736 = vadd.f32 %v126, %v720
    %v737 = vadd.f32 %v127, %v721
    %v738 = vadd.f32 %v128, %v722
    %v739 = vadd.f32 %v129, %v723
    %v740 = vadd.f32 %v130, %v724
    %v741 = vadd.f32 %v131, %v725
    %v742 = vadd.f32 %v132, %v726
    %v743 = vadd.f32 %v133, %v727
    %v744 = vadd.f32 %v134, %v728
    %v745 = vadd.f32 %v135, %v729
    %v746 = vadd.f32 %v136, %v730
    %v747 = vadd.f32 %v137, %v731
    %v748 = vadd.f32 %v138, %v732
    %v749 = vmul.f32 %v733, 0.70710677
    %v750 = vmul.f32 %v734, 0.70710677
    %v751 = vmul.f32 %v735, 0.70710677
    %v752 = vmul.f32 %v736, 0.70710677
    %v753 = vmul.f32 %v737, 0.70710677
    %v754 = vmul.f32 %v738, 0.70710677
    %v755 = vmul.f32 %v739, 0.70710677
    %v756 = vmul.f32 %v740, 0.70710677
    %v757 = vmul.f32 %v741, 0.70710677
    %v758 = vmul.f32 %v742, 0.70710677
    %v759 = vmul.f32 %v743, 0.70710677
    %v760 = vmul.f32 %v744, 0.70710677
    %v761 = vmul.f32 %v745, 0.70710677
    %v762 = vmul.f32 %v746, 0.70710677
    %v763 = vmul.f32 %v747, 0.70710677
    %v764 = vmul.f32 %v748, 0.70710677
    %v765 = vpack.c.bf16 %v750, %v749
    %v766 = vpack.c.bf16 %v752, %v751
    %v767 = vpack.c.bf16 %v754, %v753
    %v768 = vpack.c.bf16 %v756, %v755
    %v769 = vpack.c.bf16 %v758, %v757
    %v770 = vpack.c.bf16 %v760, %v759
    %v771 = vpack.c.bf16 %v762, %v761
    %v772 = vpack.c.bf16 %v764, %v763
    %v773 = vld [vmem:[#allocation11] sm:$0xf]
    %v774 = vld [vmem:[#allocation11 + $0x4] sm:$0xf]
    %v775 = vld [vmem:[#allocation11 + $0x8] sm:$0xf]
    %v776 = vld [vmem:[#allocation11 + $0xc] sm:$0xf]
    %v777 = vld [vmem:[#allocation11 + $0x10] sm:$0xf]
    %v778 = vld [vmem:[#allocation11 + $0x14] sm:$0xf]
    %v779 = vld [vmem:[#allocation11 + $0x18] sm:$0xf]
    %v780 = vld [vmem:[#allocation11 + $0x1c] sm:$0xf]
    %v781 = vld [vmem:[#allocation11 + $0x20] sm:$0xf]
    %v782 = vld [vmem:[#allocation11 + $0x24] sm:$0xf]
    %v783 = vld [vmem:[#allocation11 + $0x28] sm:$0xf]
    %v784 = vld [vmem:[#allocation11 + $0x2c] sm:$0xf]
    %v785 = vld [vmem:[#allocation11 + $0x30] sm:$0xf]
    %v786 = vld [vmem:[#allocation11 + $0x34] sm:$0xf]
    %v787 = vld [vmem:[#allocation11 + $0x38] sm:$0xf]
    %v788 = vld [vmem:[#allocation11 + $0x3c] sm:$0xf]
    %v805 = vunpack.c.l.b16 %v773
    %v806 = vunpack.c.l.b16 %v774
    %v807 = vunpack.c.l.b16 %v775
    %v808 = vunpack.c.l.b16 %v776
    %v809 = vunpack.c.l.b16 %v777
    %v810 = vunpack.c.l.b16 %v778
    %v811 = vunpack.c.l.b16 %v779
    %v812 = vunpack.c.l.b16 %v780
    %v813 = vunpack.c.l.b16 %v781
    %v814 = vunpack.c.l.b16 %v782
    %v815 = vunpack.c.l.b16 %v783
    %v816 = vunpack.c.l.b16 %v784
    %v817 = vunpack.c.l.b16 %v785
    %v818 = vunpack.c.l.b16 %v786
    %v819 = vunpack.c.l.b16 %v787
    %v820 = vunpack.c.l.b16 %v788
    %v821 = vpack.c.b16 %v806, %v805
    %v822 = vpack.c.b16 %v808, %v807
    %v823 = vpack.c.b16 %v810, %v809
    %v824 = vpack.c.b16 %v812, %v811
    %v825 = vpack.c.b16 %v814, %v813
    %v826 = vpack.c.b16 %v816, %v815
    %v827 = vpack.c.b16 %v818, %v817
    %v828 = vpack.c.b16 %v820, %v819
    %837 = vmatprep.subr.bf16.mxu0 0
    %838 = vmatpush1.bf16.msra.mxu0 %v821
    %839 = vmatprep.subr.bf16.mxu0 0
    %840 = vmatpush1.bf16.msra.mxu0 %v822
    %841 = vmatprep.subr.bf16.mxu0 0
    %842 = vmatpush1.bf16.msra.mxu0 %v823
    %843 = vmatprep.subr.bf16.mxu0 0
    %844 = vmatpush1.bf16.msra.mxu0 %v824
    %845 = vmatprep.subr.bf16.mxu0 0
    %846 = vmatpush1.bf16.msra.mxu0 %v825
    %847 = vmatprep.subr.bf16.mxu0 0
    %848 = vmatpush1.bf16.msra.mxu0 %v826
    %849 = vmatprep.subr.bf16.mxu0 0
    %850 = vmatpush1.bf16.msra.mxu0 %v827
    %851 = vmatprep.subr.bf16.mxu0 0
    %852 = vmatpush1.bf16.msra.mxu0 %v828
    %853 = vmatprep.subr.bf16.mxu0 0
    %854 = vmatpush1.bf16.msra.mxu0 0
    %855 = vmatprep.subr.bf16.mxu0 0
    %856 = vmatpush1.bf16.msra.mxu0 0
    %857 = vmatprep.subr.bf16.mxu0 0
    %858 = vmatpush1.bf16.msra.mxu0 0
    %859 = vmatprep.subr.bf16.mxu0 0
    %860 = vmatpush1.bf16.msra.mxu0 0
    %861 = vmatprep.subr.bf16.mxu0 0
    %862 = vmatpush1.bf16.msra.mxu0 0
    %863 = vmatprep.subr.bf16.mxu0 0
    %864 = vmatpush1.bf16.msra.mxu0 0
    %865 = vmatprep.subr.bf16.mxu0 0
    %866 = vmatpush1.bf16.msra.mxu0 0
    %867 = vmatprep.subr.bf16.mxu0 0
    %868 = vmatpush1.bf16.msra.mxu0 0
    %869 = vmatprep.mubr.bf16.mxu0 0
    %870 = vmatmul.mubr.bf16.gmra.mrb[0].mxu0 %v765
    %v871 = vpop.f32.mrb[0].mxu0
    %v872 = vadd.f32 0.0, %v871
    %v873 = vpop.f32.mrb[0].mxu0
    %v874 = vpop.f32.mrb[0].mxu0
    %v875 = vadd.f32 0.0, %v874
    %v876 = vpop.f32.mrb[0].mxu0
    %877 = vmatprep.mubr.bf16.mxu0 0
    %878 = vmatmul.mubr.bf16.gmra.mrb[0].mxu0 %v766
    %v879 = vpop.f32.mrb[0].mxu0
    %v880 = vadd.f32 0.0, %v879
    %v881 = vpop.f32.mrb[0].mxu0
    %v882 = vpop.f32.mrb[0].mxu0
    %v883 = vadd.f32 0.0, %v882
    %v884 = vpop.f32.mrb[0].mxu0
    %885 = vmatprep.mubr.bf16.mxu0 0
    %886 = vmatmul.mubr.bf16.gmra.mrb[0].mxu0 %v767
    %v887 = vpop.f32.mrb[0].mxu0
    %v888 = vadd.f32 0.0, %v887
    %v889 = vpop.f32.mrb[0].mxu0
    %v890 = vpop.f32.mrb[0].mxu0
    %v891 = vadd.f32 0.0, %v890
    %v892 = vpop.f32.mrb[0].mxu0
    %893 = vmatprep.mubr.bf16.mxu0 0
    %894 = vmatmul.mubr.bf16.gmra.mrb[0].mxu0 %v768
    %v895 = vpop.f32.mrb[0].mxu0
    %v896 = vadd.f32 0.0, %v895
    %v897 = vpop.f32.mrb[0].mxu0
    %v898 = vpop.f32.mrb[0].mxu0
    %v899 = vadd.f32 0.0, %v898
    %v900 = vpop.f32.mrb[0].mxu0
    %901 = vmatprep.mubr.bf16.mxu0 0
    %902 = vmatmul.mubr.bf16.gmra.mrb[0].mxu0 %v769
    %v903 = vpop.f32.mrb[0].mxu0
    %v904 = vadd.f32 0.0, %v903
    %v905 = vpop.f32.mrb[0].mxu0
    %v906 = vpop.f32.mrb[0].mxu0
    %v907 = vadd.f32 0.0, %v906
    %v908 = vpop.f32.mrb[0].mxu0
    %909 = vmatprep.mubr.bf16.mxu0 0
    %910 = vmatmul.mubr.bf16.gmra.mrb[0].mxu0 %v770
    %v911 = vpop.f32.mrb[0].mxu0
    %v912 = vadd.f32 0.0, %v911
    %v913 = vpop.f32.mrb[0].mxu0
    %v914 = vpop.f32.mrb[0].mxu0
    %v915 = vadd.f32 0.0, %v914
    %v916 = vpop.f32.mrb[0].mxu0
    %917 = vmatprep.mubr.bf16.mxu0 0
    %918 = vmatmul.mubr.bf16.gmra.mrb[0].mxu0 %v771
    %v919 = vpop.f32.mrb[0].mxu0
    %v920 = vadd.f32 0.0, %v919
    %v921 = vpop.f32.mrb[0].mxu0
    %v922 = vpop.f32.mrb[0].mxu0
    %v923 = vadd.f32 0.0, %v922
    %v924 = vpop.f32.mrb[0].mxu0
    %925 = vmatprep.mubr.bf16.mxu0 0
    %926 = vmatmul.mubr.bf16.gmra.mrb[0].mxu0 %v772
    %v927 = vpop.f32.mrb[0].mxu0
    %v928 = vadd.f32 0.0, %v927
    %v929 = vpop.f32.mrb[0].mxu0
    %v930 = vpop.f32.mrb[0].mxu0
    %v931 = vadd.f32 0.0, %v930
    %v932 = vpop.f32.mrb[0].mxu0
    %933 = vdwg.mxu0
    %v934 = vxor.u32 %v872, 2147483648
    %v935 = vxor.u32 %v875, 2147483648
    %v936 = vxor.u32 %v880, 2147483648
    %v937 = vxor.u32 %v883, 2147483648
    %v938 = vxor.u32 %v888, 2147483648
    %v939 = vxor.u32 %v891, 2147483648
    %v940 = vxor.u32 %v896, 2147483648
    %v941 = vxor.u32 %v899, 2147483648
    %v942 = vxor.u32 %v904, 2147483648
    %v943 = vxor.u32 %v907, 2147483648
    %v944 = vxor.u32 %v912, 2147483648
    %v945 = vxor.u32 %v915, 2147483648
    %v946 = vxor.u32 %v920, 2147483648
    %v947 = vxor.u32 %v923, 2147483648
    %v948 = vxor.u32 %v928, 2147483648
    %v949 = vxor.u32 %v931, 2147483648
    %v950 = vmul.f32 %v934, 1.442695
    %v951 = vpow.pop %v950
    %v952 = vmul.f32 %v935, 1.442695
    %v953 = vpow.pop %v952
    %v954 = vmul.f32 %v936, 1.442695
    %v955 = vpow.pop %v954
    %v956 = vmul.f32 %v937, 1.442695
    %v957 = vpow.pop %v956
    %v958 = vmul.f32 %v938, 1.442695
    %v959 = vpow.pop %v958
    %v960 = vmul.f32 %v939, 1.442695
    %v961 = vpow.pop %v960
    %v962 = vmul.f32 %v940, 1.442695
    %v963 = vpow.pop %v962
    %v964 = vmul.f32 %v941, 1.442695
    %v965 = vpow.pop %v964
    %v966 = vmul.f32 %v942, 1.442695
    %v967 = vpow.pop %v966
    %v968 = vmul.f32 %v943, 1.442695
    %v969 = vpow.pop %v968
    %v970 = vmul.f32 %v944, 1.442695
    %v971 = vpow.pop %v970
    %v972 = vmul.f32 %v945, 1.442695
    %v973 = vpow.pop %v972
    %v974 = vmul.f32 %v946, 1.442695
    %v975 = vpow.pop %v974
    %v976 = vmul.f32 %v947, 1.442695
    %v977 = vpow.pop %v976
    %v978 = vmul.f32 %v948, 1.442695
    %v979 = vpow.pop %v978
    %v980 = vmul.f32 %v949, 1.442695
    %v981 = vpow.pop %v980
    %v982 = vadd.f32 %v951, 1.0
    %v983 = vadd.f32 %v953, 1.0
    %v984 = vadd.f32 %v955, 1.0
    %v985 = vadd.f32 %v957, 1.0
    %v986 = vadd.f32 %v959, 1.0
    %v987 = vadd.f32 %v961, 1.0
    %v988 = vadd.f32 %v963, 1.0
    %v989 = vadd.f32 %v965, 1.0
    %v990 = vadd.f32 %v967, 1.0
    %v991 = vadd.f32 %v969, 1.0
    %v992 = vadd.f32 %v971, 1.0
    %v993 = vadd.f32 %v973, 1.0
    %v994 = vadd.f32 %v975, 1.0
    %v995 = vadd.f32 %v977, 1.0
    %v996 = vadd.f32 %v979, 1.0
    %v997 = vadd.f32 %v981, 1.0
    %v998 = vrcp.pop %v982
    %v999 = vmul.f32 1.0, %v998
    %v1000 = vrcp.pop %v983
    %v1001 = vmul.f32 1.0, %v1000
    %v1002 = vrcp.pop %v984
    %v1003 = vmul.f32 1.0, %v1002
    %v1004 = vrcp.pop %v985
    %v1005 = vmul.f32 1.0, %v1004
    %v1006 = vrcp.pop %v986
    %v1007 = vmul.f32 1.0, %v1006
    %v1008 = vrcp.pop %v987
    %v1009 = vmul.f32 1.0, %v1008
    %v1010 = vrcp.pop %v988
    %v1011 = vmul.f32 1.0, %v1010
    %v1012 = vrcp.pop %v989
    %v1013 = vmul.f32 1.0, %v1012
    %v1014 = vrcp.pop %v990
    %v1015 = vmul.f32 1.0, %v1014
    %v1016 = vrcp.pop %v991
    %v1017 = vmul.f32 1.0, %v1016
    %v1018 = vrcp.pop %v992
    %v1019 = vmul.f32 1.0, %v1018
    %v1020 = vrcp.pop %v993
    %v1021 = vmul.f32 1.0, %v1020
    %v1022 = vrcp.pop %v994
    %v1023 = vmul.f32 1.0, %v1022
    %v1024 = vrcp.pop %v995
    %v1025 = vmul.f32 1.0, %v1024
    %v1026 = vrcp.pop %v996
    %v1027 = vmul.f32 1.0, %v1026
    %v1028 = vrcp.pop %v997
    %v1029 = vmul.f32 1.0, %v1028
    %v1030 = vmul.f32 %v872, %v999
    %v1031 = vmul.f32 %v875, %v1001
    %v1032 = vmul.f32 %v880, %v1003
    %v1033 = vmul.f32 %v883, %v1005
    %v1034 = vmul.f32 %v888, %v1007
    %v1035 = vmul.f32 %v891, %v1009
    %v1036 = vmul.f32 %v896, %v1011
    %v1037 = vmul.f32 %v899, %v1013
    %v1038 = vmul.f32 %v904, %v1015
    %v1039 = vmul.f32 %v907, %v1017
    %v1040 = vmul.f32 %v912, %v1019
    %v1041 = vmul.f32 %v915, %v1021
    %v1042 = vmul.f32 %v920, %v1023
    %v1043 = vmul.f32 %v923, %v1025
    %v1044 = vmul.f32 %v928, %v1027
    %v1045 = vmul.f32 %v931, %v1029
    %v1046 = vmul.f32 %v1030, 1.6666666
    %v1047 = vmul.f32 %v1031, 1.6666666
    %v1048 = vmul.f32 %v1032, 1.6666666
    %v1049 = vmul.f32 %v1033, 1.6666666
    %v1050 = vmul.f32 %v1034, 1.6666666
    %v1051 = vmul.f32 %v1035, 1.6666666
    %v1052 = vmul.f32 %v1036, 1.6666666
    %v1053 = vmul.f32 %v1037, 1.6666666
    %v1054 = vmul.f32 %v1038, 1.6666666
    %v1055 = vmul.f32 %v1039, 1.6666666
    %v1056 = vmul.f32 %v1040, 1.6666666
    %v1057 = vmul.f32 %v1041, 1.6666666
    %v1058 = vmul.f32 %v1042, 1.6666666
    %v1059 = vmul.f32 %v1043, 1.6666666
    %v1060 = vmul.f32 %v1044, 1.6666666
    %v1061 = vmul.f32 %v1045, 1.6666666
    %v1062 = vpack.c.bf16 %v1047, %v1046
    %v1063 = vpack.c.bf16 %v1049, %v1048
    %v1064 = vpack.c.bf16 %v1051, %v1050
    %v1065 = vpack.c.bf16 %v1053, %v1052
    %v1066 = vpack.c.bf16 %v1055, %v1054
    %v1067 = vpack.c.bf16 %v1057, %v1056
    %v1068 = vpack.c.bf16 %v1059, %v1058
    %v1069 = vpack.c.bf16 %v1061, %v1060
    %v1070 = vld [vmem:[#allocation13] sm:$0xf]
    %v1071 = vld [vmem:[#allocation13 + $0x4] sm:$0xf]
    %v1072 = vld [vmem:[#allocation13 + $0x8] sm:$0xf]
    %v1073 = vld [vmem:[#allocation13 + $0xc] sm:$0xf]
    %v1074 = vld [vmem:[#allocation13 + $0x10] sm:$0xf]
    %v1075 = vld [vmem:[#allocation13 + $0x14] sm:$0xf]
    %v1076 = vld [vmem:[#allocation13 + $0x18] sm:$0xf]
    %v1077 = vld [vmem:[#allocation13 + $0x1c] sm:$0xf]
    %v1078 = vld [vmem:[#allocation13 + $0x20] sm:$0xf]
    %v1079 = vld [vmem:[#allocation13 + $0x24] sm:$0xf]
    %v1080 = vld [vmem:[#allocation13 + $0x28] sm:$0xf]
    %v1081 = vld [vmem:[#allocation13 + $0x2c] sm:$0xf]
    %v1082 = vld [vmem:[#allocation13 + $0x30] sm:$0xf]
    %v1083 = vld [vmem:[#allocation13 + $0x34] sm:$0xf]
    %v1084 = vld [vmem:[#allocation13 + $0x38] sm:$0xf]
    %v1085 = vld [vmem:[#allocation13 + $0x3c] sm:$0xf]
    %v1102 = vunpack.c.l.b16 %v1070
    %v1103 = vunpack.c.l.b16 %v1071
    %v1104 = vunpack.c.l.b16 %v1072
    %v1105 = vunpack.c.l.b16 %v1073
    %v1106 = vunpack.c.l.b16 %v1074
    %v1107 = vunpack.c.l.b16 %v1075
    %v1108 = vunpack.c.l.b16 %v1076
    %v1109 = vunpack.c.l.b16 %v1077
    %v1110 = vunpack.c.l.b16 %v1078
    %v1111 = vunpack.c.l.b16 %v1079
    %v1112 = vunpack.c.l.b16 %v1080
    %v1113 = vunpack.c.l.b16 %v1081
    %v1114 = vunpack.c.l.b16 %v1082
    %v1115 = vunpack.c.l.b16 %v1083
    %v1116 = vunpack.c.l.b16 %v1084
    %v1117 = vunpack.c.l.b16 %v1085
    %v1118 = vpack.c.b16 %v1103, %v1102
    %v1119 = vpack.c.b16 %v1105, %v1104
    %v1120 = vpack.c.b16 %v1107, %v1106
    %v1121 = vpack.c.b16 %v1109, %v1108
    %v1122 = vpack.c.b16 %v1111, %v1110
    %v1123 = vpack.c.b16 %v1113, %v1112
    %v1124 = vpack.c.b16 %v1115, %v1114
    %v1125 = vpack.c.b16 %v1117, %v1116
    %1134 = vmatprep.subr.bf16.mxu0 0
    %1135 = vmatpush1.bf16.msra.mxu0 %v1118
    %1136 = vmatprep.subr.bf16.mxu0 0
    %1137 = vmatpush1.bf16.msra.mxu0 %v1119
    %1138 = vmatprep.subr.bf16.mxu0 0
    %1139 = vmatpush1.bf16.msra.mxu0 %v1120
    %1140 = vmatprep.subr.bf16.mxu0 0
    %1141 = vmatpush1.bf16.msra.mxu0 %v1121
    %1142 = vmatprep.subr.bf16.mxu0 0
    %1143 = vmatpush1.bf16.msra.mxu0 %v1122
    %1144 = vmatprep.subr.bf16.mxu0 0
    %1145 = vmatpush1.bf16.msra.mxu0 %v1123
    %1146 = vmatprep.subr.bf16.mxu0 0
    %1147 = vmatpush1.bf16.msra.mxu0 %v1124
    %1148 = vmatprep.subr.bf16.mxu0 0
    %1149 = vmatpush1.bf16.msra.mxu0 %v1125
    %1150 = vmatprep.subr.bf16.mxu0 0
    %1151 = vmatpush1.bf16.msra.mxu0 0
    %1152 = vmatprep.subr.bf16.mxu0 0
    %1153 = vmatpush1.bf16.msra.mxu0 0
    %1154 = vmatprep.subr.bf16.mxu0 0
    %1155 = vmatpush1.bf16.msra.mxu0 0
    %1156 = vmatprep.subr.bf16.mxu0 0
    %1157 = vmatpush1.bf16.msra.mxu0 0
    %1158 = vmatprep.subr.bf16.mxu0 0
    %1159 = vmatpush1.bf16.msra.mxu0 0
    %1160 = vmatprep.subr.bf16.mxu0 0
    %1161 = vmatpush1.bf16.msra.mxu0 0
    %1162 = vmatprep.subr.bf16.mxu0 0
    %1163 = vmatpush1.bf16.msra.mxu0 0
    %1164 = vmatprep.subr.bf16.mxu0 0
    %1165 = vmatpush1.bf16.msra.mxu0 0
    %1166 = vmatprep.mubr.bf16.mxu0 0
    %1167 = vmatmul.mubr.bf16.gmra.mrb[0].mxu0 %v1062
    %v1168 = vpop.f32.mrb[0].mxu0
    %v1169 = vadd.f32 0.0, %v1168
    %v1170 = vpop.f32.mrb[0].mxu0
    %v1171 = vpop.f32.mrb[0].mxu0
    %v1172 = vadd.f32 0.0, %v1171
    %v1173 = vpop.f32.mrb[0].mxu0
    %1174 = vmatprep.mubr.bf16.mxu0 0
    %1175 = vmatmul.mubr.bf16.gmra.mrb[0].mxu0 %v1063
    %v1176 = vpop.f32.mrb[0].mxu0
    %v1177 = vadd.f32 0.0, %v1176
    %v1178 = vpop.f32.mrb[0].mxu0
    %v1179 = vpop.f32.mrb[0].mxu0
    %v1180 = vadd.f32 0.0, %v1179
    %v1181 = vpop.f32.mrb[0].mxu0
    %1182 = vmatprep.mubr.bf16.mxu0 0
    %1183 = vmatmul.mubr.bf16.gmra.mrb[0].mxu0 %v1064
    %v1184 = vpop.f32.mrb[0].mxu0
    %v1185 = vadd.f32 0.0, %v1184
    %v1186 = vpop.f32.mrb[0].mxu0
    %v1187 = vpop.f32.mrb[0].mxu0
    %v1188 = vadd.f32 0.0, %v1187
    %v1189 = vpop.f32.mrb[0].mxu0
    %1190 = vmatprep.mubr.bf16.mxu0 0
    %1191 = vmatmul.mubr.bf16.gmra.mrb[0].mxu0 %v1065
    %v1192 = vpop.f32.mrb[0].mxu0
    %v1193 = vadd.f32 0.0, %v1192
    %v1194 = vpop.f32.mrb[0].mxu0
    %v1195 = vpop.f32.mrb[0].mxu0
    %v1196 = vadd.f32 0.0, %v1195
    %v1197 = vpop.f32.mrb[0].mxu0
    %1198 = vmatprep.mubr.bf16.mxu0 0
    %1199 = vmatmul.mubr.bf16.gmra.mrb[0].mxu0 %v1066
    %v1200 = vpop.f32.mrb[0].mxu0
    %v1201 = vadd.f32 0.0, %v1200
    %v1202 = vpop.f32.mrb[0].mxu0
    %v1203 = vpop.f32.mrb[0].mxu0
    %v1204 = vadd.f32 0.0, %v1203
    %v1205 = vpop.f32.mrb[0].mxu0
    %1206 = vmatprep.mubr.bf16.mxu0 0
    %1207 = vmatmul.mubr.bf16.gmra.mrb[0].mxu0 %v1067
    %v1208 = vpop.f32.mrb[0].mxu0
    %v1209 = vadd.f32 0.0, %v1208
    %v1210 = vpop.f32.mrb[0].mxu0
    %v1211 = vpop.f32.mrb[0].mxu0
    %v1212 = vadd.f32 0.0, %v1211
    %v1213 = vpop.f32.mrb[0].mxu0
    %1214 = vmatprep.mubr.bf16.mxu0 0
    %1215 = vmatmul.mubr.bf16.gmra.mrb[0].mxu0 %v1068
    %v1216 = vpop.f32.mrb[0].mxu0
    %v1217 = vadd.f32 0.0, %v1216
    %v1218 = vpop.f32.mrb[0].mxu0
    %v1219 = vpop.f32.mrb[0].mxu0
    %v1220 = vadd.f32 0.0, %v1219
    %v1221 = vpop.f32.mrb[0].mxu0
    %1222 = vmatprep.mubr.bf16.mxu0 0
    %1223 = vmatmul.mubr.bf16.gmra.mrb[0].mxu0 %v1069
    %v1224 = vpop.f32.mrb[0].mxu0
    %v1225 = vadd.f32 0.0, %v1224
    %v1226 = vpop.f32.mrb[0].mxu0
    %v1227 = vpop.f32.mrb[0].mxu0
    %v1228 = vadd.f32 0.0, %v1227
    %v1229 = vpop.f32.mrb[0].mxu0
    %1230 = vdwg.mxu0
    %v1231 = vxor.u32 %v1169, 2147483648
    %v1232 = vxor.u32 %v1172, 2147483648
    %v1233 = vxor.u32 %v1177, 2147483648
    %v1234 = vxor.u32 %v1180, 2147483648
    %v1235 = vxor.u32 %v1185, 2147483648
    %v1236 = vxor.u32 %v1188, 2147483648
    %v1237 = vxor.u32 %v1193, 2147483648
    %v1238 = vxor.u32 %v1196, 2147483648
    %v1239 = vxor.u32 %v1201, 2147483648
    %v1240 = vxor.u32 %v1204, 2147483648
    %v1241 = vxor.u32 %v1209, 2147483648
    %v1242 = vxor.u32 %v1212, 2147483648
    %v1243 = vxor.u32 %v1217, 2147483648
    %v1244 = vxor.u32 %v1220, 2147483648
    %v1245 = vxor.u32 %v1225, 2147483648
    %v1246 = vxor.u32 %v1228, 2147483648
    %v1247 = vmul.f32 %v1231, 1.442695
    %v1248 = vpow.pop %v1247
    %v1249 = vmul.f32 %v1232, 1.442695
    %v1250 = vpow.pop %v1249
    %v1251 = vmul.f32 %v1233, 1.442695
    %v1252 = vpow.pop %v1251
    %v1253 = vmul.f32 %v1234, 1.442695
    %v1254 = vpow.pop %v1253
    %v1255 = vmul.f32 %v1235, 1.442695
    %v1256 = vpow.pop %v1255
    %v1257 = vmul.f32 %v1236, 1.442695
    %v1258 = vpow.pop %v1257
    %v1259 = vmul.f32 %v1237, 1.442695
    %v1260 = vpow.pop %v1259
    %v1261 = vmul.f32 %v1238, 1.442695
    %v1262 = vpow.pop %v1261
    %v1263 = vmul.f32 %v1239, 1.442695
    %v1264 = vpow.pop %v1263
    %v1265 = vmul.f32 %v1240, 1.442695
    %v1266 = vpow.pop %v1265
    %v1267 = vmul.f32 %v1241, 1.442695
    %v1268 = vpow.pop %v1267
    %v1269 = vmul.f32 %v1242, 1.442695
    %v1270 = vpow.pop %v1269
    %v1271 = vmul.f32 %v1243, 1.442695
    %v1272 = vpow.pop %v1271
    %v1273 = vmul.f32 %v1244, 1.442695
    %v1274 = vpow.pop %v1273
    %v1275 = vmul.f32 %v1245, 1.442695
    %v1276 = vpow.pop %v1275
    %v1277 = vmul.f32 %v1246, 1.442695
    %v1278 = vpow.pop %v1277
    %v1279 = vadd.f32 %v1248, 1.0
    %v1280 = vadd.f32 %v1250, 1.0
    %v1281 = vadd.f32 %v1252, 1.0
    %v1282 = vadd.f32 %v1254, 1.0
    %v1283 = vadd.f32 %v1256, 1.0
    %v1284 = vadd.f32 %v1258, 1.0
    %v1285 = vadd.f32 %v1260, 1.0
    %v1286 = vadd.f32 %v1262, 1.0
    %v1287 = vadd.f32 %v1264, 1.0
    %v1288 = vadd.f32 %v1266, 1.0
    %v1289 = vadd.f32 %v1268, 1.0
    %v1290 = vadd.f32 %v1270, 1.0
    %v1291 = vadd.f32 %v1272, 1.0
    %v1292 = vadd.f32 %v1274, 1.0
    %v1293 = vadd.f32 %v1276, 1.0
    %v1294 = vadd.f32 %v1278, 1.0
    %v1295 = vrcp.pop %v1279
    %v1296 = vmul.f32 1.0, %v1295
    %v1297 = vrcp.pop %v1280
    %v1298 = vmul.f32 1.0, %v1297
    %v1299 = vrcp.pop %v1281
    %v1300 = vmul.f32 1.0, %v1299
    %v1301 = vrcp.pop %v1282
    %v1302 = vmul.f32 1.0, %v1301
    %v1303 = vrcp.pop %v1283
    %v1304 = vmul.f32 1.0, %v1303
    %v1305 = vrcp.pop %v1284
    %v1306 = vmul.f32 1.0, %v1305
    %v1307 = vrcp.pop %v1285
    %v1308 = vmul.f32 1.0, %v1307
    %v1309 = vrcp.pop %v1286
    %v1310 = vmul.f32 1.0, %v1309
    %v1311 = vrcp.pop %v1287
    %v1312 = vmul.f32 1.0, %v1311
    %v1313 = vrcp.pop %v1288
    %v1314 = vmul.f32 1.0, %v1313
    %v1315 = vrcp.pop %v1289
    %v1316 = vmul.f32 1.0, %v1315
    %v1317 = vrcp.pop %v1290
    %v1318 = vmul.f32 1.0, %v1317
    %v1319 = vrcp.pop %v1291
    %v1320 = vmul.f32 1.0, %v1319
    %v1321 = vrcp.pop %v1292
    %v1322 = vmul.f32 1.0, %v1321
    %v1323 = vrcp.pop %v1293
    %v1324 = vmul.f32 1.0, %v1323
    %v1325 = vrcp.pop %v1294
    %v1326 = vmul.f32 1.0, %v1325
    %v1327 = vmul.f32 %v1169, %v1296
    %v1328 = vmul.f32 %v1172, %v1298
    %v1329 = vmul.f32 %v1177, %v1300
    %v1330 = vmul.f32 %v1180, %v1302
    %v1331 = vmul.f32 %v1185, %v1304
    %v1332 = vmul.f32 %v1188, %v1306
    %v1333 = vmul.f32 %v1193, %v1308
    %v1334 = vmul.f32 %v1196, %v1310
    %v1335 = vmul.f32 %v1201, %v1312
    %v1336 = vmul.f32 %v1204, %v1314
    %v1337 = vmul.f32 %v1209, %v1316
    %v1338 = vmul.f32 %v1212, %v1318
    %v1339 = vmul.f32 %v1217, %v1320
    %v1340 = vmul.f32 %v1220, %v1322
    %v1341 = vmul.f32 %v1225, %v1324
    %v1342 = vmul.f32 %v1228, %v1326
    %v1343 = vmul.f32 %v1327, 1.6666666
    %v1344 = vmul.f32 %v1328, 1.6666666
    %v1345 = vmul.f32 %v1329, 1.6666666
    %v1346 = vmul.f32 %v1330, 1.6666666
    %v1347 = vmul.f32 %v1331, 1.6666666
    %v1348 = vmul.f32 %v1332, 1.6666666
    %v1349 = vmul.f32 %v1333, 1.6666666
    %v1350 = vmul.f32 %v1334, 1.6666666
    %v1351 = vmul.f32 %v1335, 1.6666666
    %v1352 = vmul.f32 %v1336, 1.6666666
    %v1353 = vmul.f32 %v1337, 1.6666666
    %v1354 = vmul.f32 %v1338, 1.6666666
    %v1355 = vmul.f32 %v1339, 1.6666666
    %v1356 = vmul.f32 %v1340, 1.6666666
    %v1357 = vmul.f32 %v1341, 1.6666666
    %v1358 = vmul.f32 %v1342, 1.6666666
    %v1359 = vadd.f32 %v749, %v1343
    %v1360 = vadd.f32 %v750, %v1344
    %v1361 = vadd.f32 %v751, %v1345
    %v1362 = vadd.f32 %v752, %v1346
    %v1363 = vadd.f32 %v753, %v1347
    %v1364 = vadd.f32 %v754, %v1348
    %v1365 = vadd.f32 %v755, %v1349
    %v1366 = vadd.f32 %v756, %v1350
    %v1367 = vadd.f32 %v757, %v1351
    %v1368 = vadd.f32 %v758, %v1352
    %v1369 = vadd.f32 %v759, %v1353
    %v1370 = vadd.f32 %v760, %v1354
    %v1371 = vadd.f32 %v761, %v1355
    %v1372 = vadd.f32 %v762, %v1356
    %v1373 = vadd.f32 %v763, %v1357
    %v1374 = vadd.f32 %v764, %v1358
    %v1375 = vmul.f32 %v1359, 0.70710677
    %v1376 = vmul.f32 %v1360, 0.70710677
    %v1377 = vmul.f32 %v1361, 0.70710677
    %v1378 = vmul.f32 %v1362, 0.70710677
    %v1379 = vmul.f32 %v1363, 0.70710677
    %v1380 = vmul.f32 %v1364, 0.70710677
    %v1381 = vmul.f32 %v1365, 0.70710677
    %v1382 = vmul.f32 %v1366, 0.70710677
    %v1383 = vmul.f32 %v1367, 0.70710677
    %v1384 = vmul.f32 %v1368, 0.70710677
    %v1385 = vmul.f32 %v1369, 0.70710677
    %v1386 = vmul.f32 %v1370, 0.70710677
    %v1387 = vmul.f32 %v1371, 0.70710677
    %v1388 = vmul.f32 %v1372, 0.70710677
    %v1389 = vmul.f32 %v1373, 0.70710677
    %v1390 = vmul.f32 %v1374, 0.70710677
    %v1391 = vld [vmem:[#allocation5] sm:$0xf]
    %v1392 = vld [vmem:[#allocation5 + $0x4] sm:$0xf]
    %v1393 = vld [vmem:[#allocation5 + $0x8] sm:$0xf]
    %v1394 = vld [vmem:[#allocation5 + $0xc] sm:$0xf]
    %v1395 = vld [vmem:[#allocation5 + $0x10] sm:$0xf]
    %v1396 = vld [vmem:[#allocation5 + $0x14] sm:$0xf]
    %v1397 = vld [vmem:[#allocation5 + $0x18] sm:$0xf]
    %v1398 = vld [vmem:[#allocation5 + $0x1c] sm:$0xf]
    %v1399 = vld [vmem:[#allocation5 + $0x20] sm:$0xf]
    %v1400 = vld [vmem:[#allocation5 + $0x24] sm:$0xf]
    %v1401 = vld [vmem:[#allocation5 + $0x28] sm:$0xf]
    %v1402 = vld [vmem:[#allocation5 + $0x2c] sm:$0xf]
    %v1403 = vld [vmem:[#allocation5 + $0x30] sm:$0xf]
    %v1404 = vld [vmem:[#allocation5 + $0x34] sm:$0xf]
    %v1405 = vld [vmem:[#allocation5 + $0x38] sm:$0xf]
    %v1406 = vld [vmem:[#allocation5 + $0x3c] sm:$0xf]
    %v1407 = vld [vmem:[#allocation7] sm:$0xf]
    %v1408 = vld [vmem:[#allocation7 + $0x4] sm:$0xf]
    %v1409 = vld [vmem:[#allocation7 + $0x8] sm:$0xf]
    %v1410 = vld [vmem:[#allocation7 + $0xc] sm:$0xf]
    %v1411 = vld [vmem:[#allocation7 + $0x10] sm:$0xf]
    %v1412 = vld [vmem:[#allocation7 + $0x14] sm:$0xf]
    %v1413 = vld [vmem:[#allocation7 + $0x18] sm:$0xf]
    %v1414 = vld [vmem:[#allocation7 + $0x1c] sm:$0xf]
    %v1415 = vld [vmem:[#allocation7 + $0x20] sm:$0xf]
    %v1416 = vld [vmem:[#allocation7 + $0x24] sm:$0xf]
    %v1417 = vld [vmem:[#allocation7 + $0x28] sm:$0xf]
    %v1418 = vld [vmem:[#allocation7 + $0x2c] sm:$0xf]
    %v1419 = vld [vmem:[#allocation7 + $0x30] sm:$0xf]
    %v1420 = vld [vmem:[#allocation7 + $0x34] sm:$0xf]
    %v1421 = vld [vmem:[#allocation7 + $0x38] sm:$0xf]
    %v1422 = vld [vmem:[#allocation7 + $0x3c] sm:$0xf]
    %v1439 = vunpack.c.l.b16 %v1391
    %v1440 = vunpack.c.l.b16 %v1392
    %v1441 = vunpack.c.l.b16 %v1393
    %v1442 = vunpack.c.l.b16 %v1394
    %v1443 = vunpack.c.l.b16 %v1395
    %v1444 = vunpack.c.l.b16 %v1396
    %v1445 = vunpack.c.l.b16 %v1397
    %v1446 = vunpack.c.l.b16 %v1398
    %v1447 = vunpack.c.l.b16 %v1399
    %v1448 = vunpack.c.l.b16 %v1400
    %v1449 = vunpack.c.l.b16 %v1401
    %v1450 = vunpack.c.l.b16 %v1402
    %v1451 = vunpack.c.l.b16 %v1403
    %v1452 = vunpack.c.l.b16 %v1404
    %v1453 = vunpack.c.l.b16 %v1405
    %v1454 = vunpack.c.l.b16 %v1406
    %v1455 = vpack.c.b16 %v1440, %v1439
    %v1456 = vpack.c.b16 %v1442, %v1441
    %v1457 = vpack.c.b16 %v1444, %v1443
    %v1458 = vpack.c.b16 %v1446, %v1445
    %v1459 = vpack.c.b16 %v1448, %v1447
    %v1460 = vpack.c.b16 %v1450, %v1449
    %v1461 = vpack.c.b16 %v1452, %v1451
    %v1462 = vpack.c.b16 %v1454, %v1453
    %v1487 = vunpack.c.l.b16 %v1407
    %v1488 = vunpack.c.l.b16 %v1408
    %v1489 = vunpack.c.l.b16 %v1409
    %v1490 = vunpack.c.l.b16 %v1410
    %v1491 = vunpack.c.l.b16 %v1411
    %v1492 = vunpack.c.l.b16 %v1412
    %v1493 = vunpack.c.l.b16 %v1413
    %v1494 = vunpack.c.l.b16 %v1414
    %v1495 = vunpack.c.l.b16 %v1415
    %v1496 = vunpack.c.l.b16 %v1416
    %v1497 = vunpack.c.l.b16 %v1417
    %v1498 = vunpack.c.l.b16 %v1418
    %v1499 = vunpack.c.l.b16 %v1419
    %v1500 = vunpack.c.l.b16 %v1420
    %v1501 = vunpack.c.l.b16 %v1421
    %v1502 = vunpack.c.l.b16 %v1422
    %v1503 = vpack.c.b16 %v1488, %v1487
    %v1504 = vpack.c.b16 %v1490, %v1489
    %v1505 = vpack.c.b16 %v1492, %v1491
    %v1506 = vpack.c.b16 %v1494, %v1493
    %v1507 = vpack.c.b16 %v1496, %v1495
    %v1508 = vpack.c.b16 %v1498, %v1497
    %v1509 = vpack.c.b16 %v1500, %v1499
    %v1510 = vpack.c.b16 %v1502, %v1501
    %1519 = vmatprep.subr.bf16.mxu0 0
    %1520 = vmatpush1.bf16.msra.mxu0 %v1503
    %1521 = vmatprep.subr.bf16.mxu0 0
    %1522 = vmatpush1.bf16.msra.mxu0 %v1504
    %1523 = vmatprep.subr.bf16.mxu0 0
    %1524 = vmatpush1.bf16.msra.mxu0 %v1505
    %1525 = vmatprep.subr.bf16.mxu0 0
    %1526 = vmatpush1.bf16.msra.mxu0 %v1506
    %1527 = vmatprep.subr.bf16.mxu0 0
    %1528 = vmatpush1.bf16.msra.mxu0 %v1507
    %1529 = vmatprep.subr.bf16.mxu0 0
    %1530 = vmatpush1.bf16.msra.mxu0 %v1508
    %1531 = vmatprep.subr.bf16.mxu0 0
    %1532 = vmatpush1.bf16.msra.mxu0 %v1509
    %1533 = vmatprep.subr.bf16.mxu0 0
    %1534 = vmatpush1.bf16.msra.mxu0 %v1510
    %1535 = vmatprep.subr.bf16.mxu0 0
    %1536 = vmatpush1.bf16.msra.mxu0 0
    %1537 = vmatprep.subr.bf16.mxu0 0
    %1538 = vmatpush1.bf16.msra.mxu0 0
    %1539 = vmatprep.subr.bf16.mxu0 0
    %1540 = vmatpush1.bf16.msra.mxu0 0
    %1541 = vmatprep.subr.bf16.mxu0 0
    %1542 = vmatpush1.bf16.msra.mxu0 0
    %1543 = vmatprep.subr.bf16.mxu0 0
    %1544 = vmatpush1.bf16.msra.mxu0 0
    %1545 = vmatprep.subr.bf16.mxu0 0
    %1546 = vmatpush1.bf16.msra.mxu0 0
    %1547 = vmatprep.subr.bf16.mxu0 0
    %1548 = vmatpush1.bf16.msra.mxu0 0
    %1549 = vmatprep.subr.bf16.mxu0 0
    %1550 = vmatpush1.bf16.msra.mxu0 0
    %1551 = vmatprep.mubr.bf16.mxu0 0
    %1552 = vmatmul.mubr.bf16.gmra.mrb[0].mxu0 %v1455
    %v1553 = vpop.f32.mrb[0].mxu0
    %v1554 = vadd.f32 0.0, %v1553
    %v1555 = vpop.f32.mrb[0].mxu0
    %v1556 = vpop.f32.mrb[0].mxu0
    %v1557 = vadd.f32 0.0, %v1556
    %v1558 = vpop.f32.mrb[0].mxu0
    %1559 = vmatprep.mubr.bf16.mxu0 0
    %1560 = vmatmul.mubr.bf16.gmra.mrb[0].mxu0 %v1456
    %v1561 = vpop.f32.mrb[0].mxu0
    %v1562 = vadd.f32 0.0, %v1561
    %v1563 = vpop.f32.mrb[0].mxu0
    %v1564 = vpop.f32.mrb[0].mxu0
    %v1565 = vadd.f32 0.0, %v1564
    %v1566 = vpop.f32.mrb[0].mxu0
    %1567 = vmatprep.mubr.bf16.mxu0 0
    %1568 = vmatmul.mubr.bf16.gmra.mrb[0].mxu0 %v1457
    %v1569 = vpop.f32.mrb[0].mxu0
    %v1570 = vadd.f32 0.0, %v1569
    %v1571 = vpop.f32.mrb[0].mxu0
    %v1572 = vpop.f32.mrb[0].mxu0
    %v1573 = vadd.f32 0.0, %v1572
    %v1574 = vpop.f32.mrb[0].mxu0
    %1575 = vmatprep.mubr.bf16.mxu0 0
    %1576 = vmatmul.mubr.bf16.gmra.mrb[0].mxu0 %v1458
    %v1577 = vpop.f32.mrb[0].mxu0
    %v1578 = vadd.f32 0.0, %v1577
    %v1579 = vpop.f32.mrb[0].mxu0
    %v1580 = vpop.f32.mrb[0].mxu0
    %v1581 = vadd.f32 0.0, %v1580
    %v1582 = vpop.f32.mrb[0].mxu0
    %1583 = vmatprep.mubr.bf16.mxu0 0
    %1584 = vmatmul.mubr.bf16.gmra.mrb[0].mxu0 %v1459
    %v1585 = vpop.f32.mrb[0].mxu0
    %v1586 = vadd.f32 0.0, %v1585
    %v1587 = vpop.f32.mrb[0].mxu0
    %v1588 = vpop.f32.mrb[0].mxu0
    %v1589 = vadd.f32 0.0, %v1588
    %v1590 = vpop.f32.mrb[0].mxu0
    %1591 = vmatprep.mubr.bf16.mxu0 0
    %1592 = vmatmul.mubr.bf16.gmra.mrb[0].mxu0 %v1460
    %v1593 = vpop.f32.mrb[0].mxu0
    %v1594 = vadd.f32 0.0, %v1593
    %v1595 = vpop.f32.mrb[0].mxu0
    %v1596 = vpop.f32.mrb[0].mxu0
    %v1597 = vadd.f32 0.0, %v1596
    %v1598 = vpop.f32.mrb[0].mxu0
    %1599 = vmatprep.mubr.bf16.mxu0 0
    %1600 = vmatmul.mubr.bf16.gmra.mrb[0].mxu0 %v1461
    %v1601 = vpop.f32.mrb[0].mxu0
    %v1602 = vadd.f32 0.0, %v1601
    %v1603 = vpop.f32.mrb[0].mxu0
    %v1604 = vpop.f32.mrb[0].mxu0
    %v1605 = vadd.f32 0.0, %v1604
    %v1606 = vpop.f32.mrb[0].mxu0
    %1607 = vmatprep.mubr.bf16.mxu0 0
    %1608 = vmatmul.mubr.bf16.gmra.mrb[0].mxu0 %v1462
    %v1609 = vpop.f32.mrb[0].mxu0
    %v1610 = vadd.f32 0.0, %v1609
    %v1611 = vpop.f32.mrb[0].mxu0
    %v1612 = vpop.f32.mrb[0].mxu0
    %v1613 = vadd.f32 0.0, %v1612
    %v1614 = vpop.f32.mrb[0].mxu0
    %1615 = vdwg.mxu0
    %v1616 = vmul.f32 %v1375, %v1554
    %v1617 = vmul.f32 %v1376, %v1557
    %v1618 = vmul.f32 %v1377, %v1562
    %v1619 = vmul.f32 %v1378, %v1565
    %v1620 = vmul.f32 %v1379, %v1570
    %v1621 = vmul.f32 %v1380, %v1573
    %v1622 = vmul.f32 %v1381, %v1578
    %v1623 = vmul.f32 %v1382, %v1581
    %v1624 = vmul.f32 %v1383, %v1586
    %v1625 = vmul.f32 %v1384, %v1589
    %v1626 = vmul.f32 %v1385, %v1594
    %v1627 = vmul.f32 %v1386, %v1597
    %v1628 = vmul.f32 %v1387, %v1602
    %v1629 = vmul.f32 %v1388, %v1605
    %v1630 = vmul.f32 %v1389, %v1610
    %v1631 = vmul.f32 %v1390, %v1613
    %1632 = vst [vmem:[#allocation14] sm:$0xff] %v1616
    %1633 = vst [vmem:[#allocation14 + $0x8] sm:$0xff] %v1617
    %1634 = vst [vmem:[#allocation14 + $0x10] sm:$0xff] %v1618
    %1635 = vst [vmem:[#allocation14 + $0x18] sm:$0xff] %v1619
    %1636 = vst [vmem:[#allocation14 + $0x20] sm:$0xff] %v1620
    %1637 = vst [vmem:[#allocation14 + $0x28] sm:$0xff] %v1621
    %1638 = vst [vmem:[#allocation14 + $0x30] sm:$0xff] %v1622
    %1639 = vst [vmem:[#allocation14 + $0x38] sm:$0xff] %v1623
    %1640 = vst [vmem:[#allocation14 + $0x40] sm:$0xff] %v1624
    %1641 = vst [vmem:[#allocation14 + $0x48] sm:$0xff] %v1625
    %1642 = vst [vmem:[#allocation14 + $0x50] sm:$0xff] %v1626
    %1643 = vst [vmem:[#allocation14 + $0x58] sm:$0xff] %v1627
    %1644 = vst [vmem:[#allocation14 + $0x60] sm:$0xff] %v1628
    %1645 = vst [vmem:[#allocation14 + $0x68] sm:$0xff] %v1629
    %1646 = vst [vmem:[#allocation14 + $0x70] sm:$0xff] %v1630
    %1647 = vst [vmem:[#allocation14 + $0x78] sm:$0xff] %v1631
    // Predicated region
    $region58: #{tpu_custom_call.1} parent=1 // pred_check
      _
    $region59: #{tpu_custom_call.1} parent=1 // pred_check_branch
      %1649 = sbr.rel (0) target = $region61
    $region60: #{tpu_custom_call.1} parent=1 // pred_region
      %s1651 = ssub.s32 2048, 2048
      %1652 = vsyncadd [#allocation4], %s1651
      %s1653 = sshll.u32 [#allocation14], 4
      %s1654 = int_to_ptr.vmem [resolvable:$true] %s1653
      %1659 = dma.vmem_to_hbm [thread:$0]  %s1654, 2048, %s7, [#allocation4], 128, 128, 8
    $region61: #{tpu_custom_call.1} parent=1 // pred_fallthru
      _
    // Predicated region
    $region62: #{tpu_custom_call.1} parent=1 // pred_check
      _
    $region63: #{tpu_custom_call.1} parent=1 // pred_check_branch
      %1661 = sbr.rel (0) target = $region65
    $region64: #{tpu_custom_call.1} parent=1 // pred_region
      %1662 = dma.done [#allocation4], 2048
    $region65: #{tpu_custom_call.1} parent=1 // pred_fallthru
      _
    %1663 = vsyncpa [#allocation3], 1
    %1664 = vsyncpa [#allocation6], 1
    %1665 = vsyncpa [#allocation9], 1
    %1666 = vsyncpa [#allocation12], 1
    %1667 = vsyncpa [#allocation4], 1

</llo_original>
